<compile_context>
chip_gen: v7x
topology: tpu7x:2x2x1
jax: 0.10.0
libtpu: 0.0.40
codegen_flags: <defaults>
</compile_context>

<pallas_src>
import jax
import jax.numpy as jnp
from jax.experimental import pallas as pl
from jax.experimental.pallas import tpu as pltpu


_OUT_LANES = 128  # lane-dense output slab width (full, unmasked vector stores)


def _leaky_relu(x, slope=0.2):
    return jnp.where(x > 0, x, slope * x)


def _round_up(x, m):
    return ((x + m - 1) // m) * m


def _cdiv(a, b):
    return -(-a // b)


def _make_kernel(num_hidden_layers):
    """Kernel body for a fixed (static) number of hidden layers."""

    def kernel(feat_ref, cls_ref, w1f_ref, w1c_ref, b1_ref, *rest):
        refs = list(rest)
        out_ref = refs.pop()
        bend_ref = refs.pop()
        wend_ref = refs.pop()

        w_dtype = w1f_ref.dtype
        # In-kernel cast (VPU): features arrive in their native dtype, so the
        # wrapper never makes an extra HBM copy just to change dtype.
        feat = feat_ref[...].astype(w_dtype)         # [TM, F]
        cls = cls_ref[...]                           # [TM, 1] int32
        tm = feat.shape[0]
        c_pad = w1c_ref.shape[0]                     # lane-padded num_classes

        # One-hot built on the VPU: iota(lane) == class id.
        onehot = (jax.lax.broadcasted_iota(jnp.int32, (tm, c_pad), 1)
                  == cls)                            # bool [TM, C_pad]

        # fc_1 with the embedding lookup folded in:
        #   h = feat @ W1f + onehot @ (E @ W1e) + b1
        h = (jnp.dot(feat, w1f_ref[...], preferred_element_type=jnp.float32)
             + jnp.dot(onehot.astype(w_dtype), w1c_ref[...],
                       preferred_element_type=jnp.float32)
             + b1_ref[...])
        h = _leaky_relu(h)                           # f32 [TM, H_pad]

        # Optional fc_2 / fc_3 (statically unrolled).
        i = 0
        for _ in range(num_hidden_layers - 1):
            w = refs[i]
            b = refs[i + 1]
            i += 2
            h = _leaky_relu(
                jnp.dot(h.astype(w.dtype), w[...],
                        preferred_element_type=jnp.float32) + b[...])

        # fc_end -> logits [TM, C_pad] (padded logit columns are exactly 0 and
        # never selected because class ids < original num_classes).
        logits = (jnp.dot(h.astype(wend_ref.dtype), wend_ref[...],
                          preferred_element_type=jnp.float32)
                  + bend_ref[...])

        # _select_logits: logits[arange(TM), classes] -> [TM, 1]
        selected = jnp.sum(jnp.where(onehot, logits, 0.0),
                           axis=-1, keepdims=True)

        # Lane-dense store: broadcast across 128 lanes (unmasked vst);
        # the wrapper reads column 0 back.
        out_ref[...] = jnp.broadcast_to(selected, out_ref.shape)

    return kernel


def prepare_params(params, *, num_hidden_layers, compute_dtype=jnp.float32,
                   lane_multiple=128):
    """One-off param prep (NOT on the per-call hot path):
      * [in, out] layouts,
      * embedding folded into fc_1 (W1c = E @ W1e),
      * hidden_size / num_classes zero-padded to `lane_multiple` so every
        in-kernel matmul uses full lane tiles (use 256 on v6e/v7x if desired).
    Zero-padding is semantics-preserving: padded hidden units stay exactly 0
    through LeakyReLU, padded logit columns are 0 and never selected."""
    emb = params["embedding"].astype(jnp.float32)            # [C, input_size]
    input_size = emb.shape[1]
    num_classes = emb.shape[0]
    w1 = params["fc1_w"].astype(jnp.float32)                 # [H, F + input_size]
    hidden = w1.shape[0]
    feat_in = w1.shape[1] - input_size
    w1f = jnp.transpose(w1[:, :feat_in])                     # [F, H]
    w1e = jnp.transpose(w1[:, feat_in:])                     # [input_size, H]
    w1c = emb @ w1e                                          # [C, H]

    h_pad = _round_up(hidden, lane_multiple)
    c_pad = _round_up(num_classes, lane_multiple)

    def pad2(x, rows, cols):
        return jnp.pad(x, ((0, rows - x.shape[0]), (0, cols - x.shape[1])))

    prep = {
        "w1f": pad2(w1f, feat_in, h_pad).astype(compute_dtype),
        "w1c": pad2(w1c, c_pad, h_pad).astype(compute_dtype),
        "b1": pad2(params["fc1_b"].astype(jnp.float32)[None, :], 1, h_pad),
        "wend": pad2(jnp.transpose(params["fcend_w"]).astype(jnp.float32),
                     h_pad, c_pad).astype(compute_dtype),
        "bend": pad2(params["fcend_b"].astype(jnp.float32)[None, :], 1, c_pad),
        "num_classes": num_classes,
    }
    if num_hidden_layers > 1:
        prep["w2"] = pad2(jnp.transpose(params["fc2_w"]).astype(jnp.float32),
                          h_pad, h_pad).astype(compute_dtype)
        prep["b2"] = pad2(params["fc2_b"].astype(jnp.float32)[None, :], 1, h_pad)
    if num_hidden_layers > 2:
        prep["w3"] = pad2(jnp.transpose(params["fc3_w"]).astype(jnp.float32),
                          h_pad, h_pad).astype(compute_dtype)
        prep["b3"] = pad2(params["fc3_b"].astype(jnp.float32)[None, :], 1, h_pad)
    return prep


def cond_disc_mlp_forward(features, classes, prep, *, num_classes,
                          num_hidden_layers, block_m=512):
    """Batch-tiled forward. `prep` comes from prepare_params()."""
    B, F = features.shape
    assert prep["w1c"].shape[0] >= num_classes

    # Batch tile: multiple of 8 sublanes, big by default so the grid collapses
    # to 1-2 steps (per-step pipeline overhead dominates at these shapes).
    tm = _round_up(max(1, min(block_m, B)), 8)
    n_tiles = _cdiv(B, tm)
    if n_tiles > 1 and n_tiles % 2 == 1:
        # v7x has 2 TensorCores sharing the single "parallel" axis: keep the
        # tile count even to avoid a 2+1 imbalance on the last step.
        tm = _round_up(_cdiv(B, n_tiles + 1), 8)
        n_tiles = _cdiv(B, tm)
    grid = (n_tiles,)

    # No jnp.pad of features and no astype: the ragged last block is handled by
    # Pallas (padded rows are never returned); dtype cast happens in-kernel.
    cls2d = classes.reshape(-1, 1).astype(jnp.int32)   # tiny (B x 4 bytes)

    operands = [features, cls2d, prep["w1f"], prep["w1c"], prep["b1"]]
    if num_hidden_layers > 1:
        operands += [prep["w2"], prep["b2"]]
    if num_hidden_layers > 2:
        operands += [prep["w3"], prep["b3"]]
    operands += [prep["wend"], prep["bend"]]

    # Explicit VMEM budget from the real footprint (conservatively assume the
    # weights are double-buffered), clamped to a range that is safe on
    # v5e (16 MiB scoped default) and v7x (64 MiB physical).
    weight_bytes = sum(int(op.size) * op.dtype.itemsize for op in operands[2:])
    io_tile_bytes = tm * (F * features.dtype.itemsize + 4 + _OUT_LANES * 4)
    vmem_limit = int(min(64 << 20,
                         max(32 << 20,
                             2 * weight_bytes + 2 * io_tile_bytes + (2 << 20))))

    out_spec = pl.BlockSpec((tm, _OUT_LANES), lambda i: (i, 0))
    kernel = _make_kernel(num_hidden_layers)

    def _invoke(weight_mode):
        in_specs = [
            pl.BlockSpec((tm, F), lambda i: (i, 0)),   # features: batch-tiled
            pl.BlockSpec((tm, 1), lambda i: (i, 0)),   # class ids: batch-tiled
        ]
        # Weights / biases: full-array blocks with constant index map ->
        # fetched once, VMEM-resident for every grid step.  When supported,
        # single-buffer them (their block index never changes).
        for op in operands[2:]:
            if weight_mode is None:
                in_specs.append(pl.BlockSpec(op.shape, lambda i: (0, 0)))
            else:
                in_specs.append(pl.BlockSpec(op.shape, lambda i: (0, 0),
                                             pipeline_mode=weight_mode))
        return pl.pallas_call(
            kernel,
            out_shape=jax.ShapeDtypeStruct((B, _OUT_LANES), jnp.float32),
            grid_spec=pltpu.PrefetchScalarGridSpec(
                num_scalar_prefetch=0,
                grid=grid,
                in_specs=in_specs,
                out_specs=out_spec),
            compiler_params=pltpu.CompilerParams(
                dimension_semantics=("parallel",),
                vmem_limit_bytes=vmem_limit),
        )(*operands)

    try:
        # Single-buffer the VMEM-resident weights (halves weight residency,
        # important on v7x's 64 MiB VMEM / v5e's small scoped default).
        out = jax.block_until_ready(_invoke(pl.Buffered(1)))
    except Exception:
        # Fallback: default double-buffered specs (always supported).
        out = _invoke(None)

    return out[:, :1]


# ---------------------------------------------------------------------------
# Init + pure-JAX reference (mirrors the PyTorch module)
# ---------------------------------------------------------------------------

def _kaiming_normal(key, shape):
    fan_in = shape[1]
    std = (2.0 / fan_in) ** 0.5
    return std * jax.random.normal(key, shape, dtype=jnp.float32)


def init_params(key, input_size, num_classes, hidden_size, num_members,
                num_hidden_layers):
    keys = jax.random.split(key, 8)
    params = {
        "embedding": jax.random.normal(keys[0], (num_classes, input_size),
                                       dtype=jnp.float32),
        "fc1_w": _kaiming_normal(keys[1],
                                 (hidden_size, input_size * (num_members + 1))),
        "fc1_b": jnp.zeros((hidden_size,), jnp.float32),
        "fcend_w": _kaiming_normal(keys[4], (num_classes, hidden_size)),
        "fcend_b": jnp.zeros((num_classes,), jnp.float32),
    }
    if num_hidden_layers > 1:
        params["fc2_w"] = _kaiming_normal(keys[2], (hidden_size, hidden_size))
        params["fc2_b"] = jnp.zeros((hidden_size,), jnp.float32)
    if num_hidden_layers > 2:
        params["fc3_w"] = _kaiming_normal(keys[3], (hidden_size, hidden_size))
        params["fc3_b"] = jnp.zeros((hidden_size,), jnp.float32)
    return params


def reference_forward(features, classes, params, *, num_classes,
                      num_hidden_layers):
    emb = params["embedding"][classes]                     # [B, input_size]
    x = jnp.concatenate([features, emb], axis=1)
    x = _leaky_relu(x @ params["fc1_w"].T + params["fc1_b"])
    if num_hidden_layers > 1:
        x = _leaky_relu(x @ params["fc2_w"].T + params["fc2_b"])
    if num_hidden_layers > 2:
        x = _leaky_relu(x @ params["fc3_w"].T + params["fc3_b"])
    logits = x @ params["fcend_w"].T + params["fcend_b"]
    sel = logits[jnp.arange(logits.shape[0]), classes]
    return sel.reshape(-1, 1)


if __name__ == "__main__":
    input_size = 16
    num_members = 2
    num_classes = 4
    hidden_size = 32
    num_hidden_layers = 3

    key = jax.random.PRNGKey(0)
    k_feat, k_cls, k_param, k_feat2, k_cls2 = jax.random.split(key, 5)

    params = init_params(k_param, input_size, num_classes, hidden_size,
                         num_members, num_hidden_layers)
    prep32 = prepare_params(params, num_hidden_layers=num_hidden_layers,
                            compute_dtype=jnp.float32)

    # --- small case (single tile), f32 ---
    B = 8
    features = jax.random.normal(
        k_feat, (B, input_size * num_members), dtype=jnp.float32)
    classes = jax.random.randint(k_cls, (B,), 0, num_classes, dtype=jnp.int32)

    out = jax.block_until_ready(
        cond_disc_mlp_forward(features, classes, prep32,
                              num_classes=num_classes,
                              num_hidden_layers=num_hidden_layers))
    ref = reference_forward(features, classes, params,
                            num_classes=num_classes,
                            num_hidden_layers=num_hidden_layers)
    assert out.shape == (B, 1), out.shape
    assert jnp.allclose(out, ref, atol=1e-4, rtol=1e-4), (out, ref)

    # --- larger case, default block_m (single fat ragged tile), f32 ---
    B2 = 300
    features2 = jax.random.normal(
        k_feat2, (B2, input_size * num_members), dtype=jnp.float32)
    classes2 = jax.random.randint(k_cls2, (B2,), 0, num_classes, dtype=jnp.int32)

    ref2 = reference_forward(features2, classes2, params,
                             num_classes=num_classes,
                             num_hidden_layers=num_hidden_layers)

    out2 = jax.block_until_ready(
        cond_disc_mlp_forward(features2, classes2, prep32,
                              num_classes=num_classes,
                              num_hidden_layers=num_hidden_layers))
    assert out2.shape == (B2, 1), out2.shape
    assert jnp.allclose(out2, ref2, atol=1e-3, rtol=1e-4)

    # --- larger case, small block_m (multi-tile grid + ragged last block) ---
    out3 = jax.block_until_ready(
        cond_disc_mlp_forward(features2, classes2, prep32,
                              num_classes=num_classes,
                              num_hidden_layers=num_hidden_layers,
                              block_m=128))
    assert out3.shape == (B2, 1), out3.shape
    assert jnp.allclose(out3, ref2, atol=1e-3, rtol=1e-4)

    # --- bf16 weight path (f32 accumulation, in-kernel activation cast) ---
    prep16 = prepare_params(params, num_hidden_layers=num_hidden_layers,
                            compute_dtype=jnp.bfloat16)
    out4 = jax.block_until_ready(
        cond_disc_mlp_forward(features2, classes2, prep16,
                              num_classes=num_classes,
                              num_hidden_layers=num_hidden_layers,
                              block_m=128))
    assert out4.shape == (B2, 1), out4.shape
    assert bool(jnp.all(jnp.isfinite(out4)))
    assert jnp.allclose(out4, ref2, atol=0.5, rtol=0.1)

    print("KERNEL_OK")
</pallas_src>

<mosaic_0001>
module attributes {stable_mosaic.version = 11 : i64} {
  func.func @kernel(%arg0: i32, %arg1: memref<8x32xf32, #tpu.memory_space<vmem>>, %arg2: memref<8x1xi32, #tpu.memory_space<vmem>>, %arg3: memref<32x128xf32, #tpu.memory_space<vmem>>, %arg4: memref<128x128xf32, #tpu.memory_space<vmem>>, %arg5: memref<1x128xf32, #tpu.memory_space<vmem>>, %arg6: memref<128x128xf32, #tpu.memory_space<vmem>>, %arg7: memref<1x128xf32, #tpu.memory_space<vmem>>, %arg8: memref<128x128xf32, #tpu.memory_space<vmem>>, %arg9: memref<1x128xf32, #tpu.memory_space<vmem>>, %arg10: memref<128x128xf32, #tpu.memory_space<vmem>>, %arg11: memref<1x128xf32, #tpu.memory_space<vmem>>, %arg12: memref<8x128xf32, #tpu.memory_space<vmem>>) attributes {dimension_semantics = [#tpu.dimension_semantics<parallel>], iteration_bounds = array<i64: 1>, scalar_prefetch = 0 : i64, scratch_operands = 0 : i64, tpu.core_type = #tpu.core_type<tc>, window_params = [{transform_indices = @transform_0, window_bounds = array<i64: 8, 32>}, {transform_indices = @transform_1, window_bounds = array<i64: 8, 1>}, {pipeline_mode = #tpu.pipeline_mode<synchronous>, transform_indices = @transform_2, window_bounds = array<i64: 32, 128>}, {pipeline_mode = #tpu.pipeline_mode<synchronous>, transform_indices = @transform_3, window_bounds = array<i64: 128, 128>}, {pipeline_mode = #tpu.pipeline_mode<synchronous>, transform_indices = @transform_4, window_bounds = array<i64: 1, 128>}, {pipeline_mode = #tpu.pipeline_mode<synchronous>, transform_indices = @transform_5, window_bounds = array<i64: 128, 128>}, {pipeline_mode = #tpu.pipeline_mode<synchronous>, transform_indices = @transform_6, window_bounds = array<i64: 1, 128>}, {pipeline_mode = #tpu.pipeline_mode<synchronous>, transform_indices = @transform_7, window_bounds = array<i64: 128, 128>}, {pipeline_mode = #tpu.pipeline_mode<synchronous>, transform_indices = @transform_8, window_bounds = array<i64: 1, 128>}, {pipeline_mode = #tpu.pipeline_mode<synchronous>, transform_indices = @transform_9, window_bounds = array<i64: 128, 128>}, {pipeline_mode = #tpu.pipeline_mode<synchronous>, transform_indices = @transform_10, window_bounds = array<i64: 1, 128>}, {transform_indices = @transform_11, window_bounds = array<i64: 8, 128>}]} {
    %c0 = arith.constant 0 : index
    %c0_0 = arith.constant 0 : index
    %0 = vector.load %arg1[%c0, %c0_0] : memref<8x32xf32, #tpu.memory_space<vmem>>, vector<8x32xf32>
    %c0_1 = arith.constant 0 : index
    %c0_2 = arith.constant 0 : index
    %1 = vector.load %arg2[%c0_1, %c0_2] : memref<8x1xi32, #tpu.memory_space<vmem>>, vector<8x1xi32>
    %2 = tpu.iota {dimensions = array<i32: 1>} : vector<8x128xi32>
    %3 = vector.broadcast %1 : vector<8x1xi32> to vector<8x128xi32>
    %4 = arith.cmpi eq, %2, %3 : vector<8x128xi32>
    %c0_3 = arith.constant 0 : index
    %c0_4 = arith.constant 0 : index
    %5 = vector.load %arg3[%c0_3, %c0_4] : memref<32x128xf32, #tpu.memory_space<vmem>>, vector<32x128xf32>
    %cst = arith.constant dense<0.000000e+00> : vector<8x128xf32>
    %6 = tpu.matmul %0, %5, %cst {dimension_numbers = #tpu.dot_dimension_numbers<[1], [0], [0], [1], [0, 0, 1, 1], [], []>} : vector<8x32xf32>, vector<32x128xf32>, vector<8x128xf32> -> vector<8x128xf32>
    %7 = arith.extui %4 : vector<8x128xi1> to vector<8x128xi32>
    %8 = arith.sitofp %7 : vector<8x128xi32> to vector<8x128xf32>
    %c0_5 = arith.constant 0 : index
    %c0_6 = arith.constant 0 : index
    %9 = vector.load %arg4[%c0_5, %c0_6] : memref<128x128xf32, #tpu.memory_space<vmem>>, vector<128x128xf32>
    %cst_7 = arith.constant dense<0.000000e+00> : vector<8x128xf32>
    %10 = tpu.matmul %8, %9, %cst_7 {dimension_numbers = #tpu.dot_dimension_numbers<[1], [0], [0], [1], [0, 0, 1, 1], [], []>} : vector<8x128xf32>, vector<128x128xf32>, vector<8x128xf32> -> vector<8x128xf32>
    %11 = arith.addf %6, %10 : vector<8x128xf32>
    %c0_8 = arith.constant 0 : index
    %c0_9 = arith.constant 0 : index
    %12 = vector.load %arg5[%c0_8, %c0_9] : memref<1x128xf32, #tpu.memory_space<vmem>>, vector<1x128xf32>
    %13 = vector.broadcast %12 : vector<1x128xf32> to vector<8x128xf32>
    %14 = arith.addf %11, %13 : vector<8x128xf32>
    %cst_10 = arith.constant 0.000000e+00 : f32
    %15 = vector.broadcast %cst_10 : f32 to vector<8x128xf32>
    %16 = arith.cmpf ogt, %14, %15 : vector<8x128xf32>
    %cst_11 = arith.constant 2.000000e-01 : f32
    %17 = vector.broadcast %cst_11 : f32 to vector<8x128xf32>
    %18 = arith.mulf %17, %14 : vector<8x128xf32>
    %19 = arith.select %16, %14, %18 : vector<8x128xi1>, vector<8x128xf32>
    %c0_12 = arith.constant 0 : index
    %c0_13 = arith.constant 0 : index
    %20 = vector.load %arg6[%c0_12, %c0_13] : memref<128x128xf32, #tpu.memory_space<vmem>>, vector<128x128xf32>
    %cst_14 = arith.constant dense<0.000000e+00> : vector<8x128xf32>
    %21 = tpu.matmul %19, %20, %cst_14 {dimension_numbers = #tpu.dot_dimension_numbers<[1], [0], [0], [1], [0, 0, 1, 1], [], []>} : vector<8x128xf32>, vector<128x128xf32>, vector<8x128xf32> -> vector<8x128xf32>
    %c0_15 = arith.constant 0 : index
    %c0_16 = arith.constant 0 : index
    %22 = vector.load %arg7[%c0_15, %c0_16] : memref<1x128xf32, #tpu.memory_space<vmem>>, vector<1x128xf32>
    %23 = vector.broadcast %22 : vector<1x128xf32> to vector<8x128xf32>
    %24 = arith.addf %21, %23 : vector<8x128xf32>
    %cst_17 = arith.constant 0.000000e+00 : f32
    %25 = vector.broadcast %cst_17 : f32 to vector<8x128xf32>
    %26 = arith.cmpf ogt, %24, %25 : vector<8x128xf32>
    %cst_18 = arith.constant 2.000000e-01 : f32
    %27 = vector.broadcast %cst_18 : f32 to vector<8x128xf32>
    %28 = arith.mulf %27, %24 : vector<8x128xf32>
    %29 = arith.select %26, %24, %28 : vector<8x128xi1>, vector<8x128xf32>
    %c0_19 = arith.constant 0 : index
    %c0_20 = arith.constant 0 : index
    %30 = vector.load %arg8[%c0_19, %c0_20] : memref<128x128xf32, #tpu.memory_space<vmem>>, vector<128x128xf32>
    %cst_21 = arith.constant dense<0.000000e+00> : vector<8x128xf32>
    %31 = tpu.matmul %29, %30, %cst_21 {dimension_numbers = #tpu.dot_dimension_numbers<[1], [0], [0], [1], [0, 0, 1, 1], [], []>} : vector<8x128xf32>, vector<128x128xf32>, vector<8x128xf32> -> vector<8x128xf32>
    %c0_22 = arith.constant 0 : index
    %c0_23 = arith.constant 0 : index
    %32 = vector.load %arg9[%c0_22, %c0_23] : memref<1x128xf32, #tpu.memory_space<vmem>>, vector<1x128xf32>
    %33 = vector.broadcast %32 : vector<1x128xf32> to vector<8x128xf32>
    %34 = arith.addf %31, %33 : vector<8x128xf32>
    %cst_24 = arith.constant 0.000000e+00 : f32
    %35 = vector.broadcast %cst_24 : f32 to vector<8x128xf32>
    %36 = arith.cmpf ogt, %34, %35 : vector<8x128xf32>
    %cst_25 = arith.constant 2.000000e-01 : f32
    %37 = vector.broadcast %cst_25 : f32 to vector<8x128xf32>
    %38 = arith.mulf %37, %34 : vector<8x128xf32>
    %39 = arith.select %36, %34, %38 : vector<8x128xi1>, vector<8x128xf32>
    %c0_26 = arith.constant 0 : index
    %c0_27 = arith.constant 0 : index
    %40 = vector.load %arg10[%c0_26, %c0_27] : memref<128x128xf32, #tpu.memory_space<vmem>>, vector<128x128xf32>
    %cst_28 = arith.constant dense<0.000000e+00> : vector<8x128xf32>
    %41 = tpu.matmul %39, %40, %cst_28 {dimension_numbers = #tpu.dot_dimension_numbers<[1], [0], [0], [1], [0, 0, 1, 1], [], []>} : vector<8x128xf32>, vector<128x128xf32>, vector<8x128xf32> -> vector<8x128xf32>
    %c0_29 = arith.constant 0 : index
    %c0_30 = arith.constant 0 : index
    %42 = vector.load %arg11[%c0_29, %c0_30] : memref<1x128xf32, #tpu.memory_space<vmem>>, vector<1x128xf32>
    %43 = vector.broadcast %42 : vector<1x128xf32> to vector<8x128xf32>
    %44 = arith.addf %41, %43 : vector<8x128xf32>
    %cst_31 = arith.constant 0.000000e+00 : f32
    %45 = vector.broadcast %cst_31 : f32 to vector<8x128xf32>
    %46 = arith.select %4, %44, %45 : vector<8x128xi1>, vector<8x128xf32>
    %cst_32 = arith.constant dense<0.000000e+00> : vector<8xf32>
    %47 = vector.multi_reduction <add>, %46, %cst_32 [1] : vector<8x128xf32> to vector<8xf32>
    %48 = vector.shape_cast %47 : vector<8xf32> to vector<8x1xf32>
    %49 = vector.shape_cast %48 : vector<8x1xf32> to vector<8x1xf32>
    %50 = vector.broadcast %49 : vector<8x1xf32> to vector<8x128xf32>
    %c0_33 = arith.constant 0 : index
    %c0_34 = arith.constant 0 : index
    %51 = vector.load %arg12[%c0_33, %c0_34] : memref<8x128xf32, #tpu.memory_space<vmem>>, vector<8x128xf32>
    tpu.vector_store %arg12[%c0_33, %c0_34], %50 {strides = array<i32>} : memref<8x128xf32, #tpu.memory_space<vmem>>, vector<8x128xf32>,
    return
  }
  func.func @transform_0(%arg0: i32) -> (i32, i32) {
    %c0_i32 = arith.constant 0 : i32
    %c0_i32_0 = arith.constant 0 : i32
    return %arg0, %c0_i32 : i32, i32
  }
  func.func @transform_1(%arg0: i32) -> (i32, i32) {
    %c0_i32 = arith.constant 0 : i32
    %c0_i32_0 = arith.constant 0 : i32
    return %arg0, %c0_i32 : i32, i32
  }
  func.func @transform_2(%arg0: i32) -> (i32, i32) {
    %c0_i32 = arith.constant 0 : i32
    %c0_i32_0 = arith.constant 0 : i32
    %c0_i32_1 = arith.constant 0 : i32
    return %c0_i32, %c0_i32_0 : i32, i32
  }
  func.func @transform_3(%arg0: i32) -> (i32, i32) {
    %c0_i32 = arith.constant 0 : i32
    %c0_i32_0 = arith.constant 0 : i32
    %c0_i32_1 = arith.constant 0 : i32
    return %c0_i32, %c0_i32_0 : i32, i32
  }
  func.func @transform_4(%arg0: i32) -> (i32, i32) {
    %c0_i32 = arith.constant 0 : i32
    %c0_i32_0 = arith.constant 0 : i32
    %c0_i32_1 = arith.constant 0 : i32
    return %c0_i32, %c0_i32_0 : i32, i32
  }
  func.func @transform_5(%arg0: i32) -> (i32, i32) {
    %c0_i32 = arith.constant 0 : i32
    %c0_i32_0 = arith.constant 0 : i32
    %c0_i32_1 = arith.constant 0 : i32
    return %c0_i32, %c0_i32_0 : i32, i32
  }
  func.func @transform_6(%arg0: i32) -> (i32, i32) {
    %c0_i32 = arith.constant 0 : i32
    %c0_i32_0 = arith.constant 0 : i32
    %c0_i32_1 = arith.constant 0 : i32
    return %c0_i32, %c0_i32_0 : i32, i32
  }
  func.func @transform_7(%arg0: i32) -> (i32, i32) {
    %c0_i32 = arith.constant 0 : i32
    %c0_i32_0 = arith.constant 0 : i32
    %c0_i32_1 = arith.constant 0 : i32
    return %c0_i32, %c0_i32_0 : i32, i32
  }
  func.func @transform_8(%arg0: i32) -> (i32, i32) {
    %c0_i32 = arith.constant 0 : i32
    %c0_i32_0 = arith.constant 0 : i32
    %c0_i32_1 = arith.constant 0 : i32
    return %c0_i32, %c0_i32_0 : i32, i32
  }
  func.func @transform_9(%arg0: i32) -> (i32, i32) {
    %c0_i32 = arith.constant 0 : i32
    %c0_i32_0 = arith.constant 0 : i32
    %c0_i32_1 = arith.constant 0 : i32
    return %c0_i32, %c0_i32_0 : i32, i32
  }
  func.func @transform_10(%arg0: i32) -> (i32, i32) {
    %c0_i32 = arith.constant 0 : i32
    %c0_i32_0 = arith.constant 0 : i32
    %c0_i32_1 = arith.constant 0 : i32
    return %c0_i32, %c0_i32_0 : i32, i32
  }
  func.func @transform_11(%arg0: i32) -> (i32, i32) {
    %c0_i32 = arith.constant 0 : i32
    %c0_i32_0 = arith.constant 0 : i32
    return %arg0, %c0_i32 : i32, i32
  }
}

module attributes {stable_mosaic.version = 11 : i64} {
  func.func @kernel(%arg0: i32, %arg1: memref<8x32xf32, #tpu.memory_space<vmem>>, %arg2: memref<8x1xi32, #tpu.memory_space<vmem>>, %arg3: memref<32x128xf32, #tpu.memory_space<vmem>>, %arg4: memref<128x128xf32, #tpu.memory_space<vmem>>, %arg5: memref<1x128xf32, #tpu.memory_space<vmem>>, %arg6: memref<128x128xf32, #tpu.memory_space<vmem>>, %arg7: memref<1x128xf32, #tpu.memory_space<vmem>>, %arg8: memref<128x128xf32, #tpu.memory_space<vmem>>, %arg9: memref<1x128xf32, #tpu.memory_space<vmem>>, %arg10: memref<128x128xf32, #tpu.memory_space<vmem>>, %arg11: memref<1x128xf32, #tpu.memory_space<vmem>>, %arg12: memref<8x128xf32, #tpu.memory_space<vmem>>) attributes {dimension_semantics = [#tpu.dimension_semantics<parallel>], iteration_bounds = array<i64: 1>, scalar_prefetch = 0 : i64, scratch_operands = 0 : i64, tpu.core_type = #tpu.core_type<tc>, window_params = [{transform_indices = @transform_0, window_bounds = array<i64: 8, 32>}, {transform_indices = @transform_1, window_bounds = array<i64: 8, 1>}, {pipeline_mode = #tpu.pipeline_mode<synchronous>, transform_indices = @transform_2, window_bounds = array<i64: 32, 128>}, {pipeline_mode = #tpu.pipeline_mode<synchronous>, transform_indices = @transform_3, window_bounds = array<i64: 128, 128>}, {pipeline_mode = #tpu.pipeline_mode<synchronous>, transform_indices = @transform_4, window_bounds = array<i64: 1, 128>}, {pipeline_mode = #tpu.pipeline_mode<synchronous>, transform_indices = @transform_5, window_bounds = array<i64: 128, 128>}, {pipeline_mode = #tpu.pipeline_mode<synchronous>, transform_indices = @transform_6, window_bounds = array<i64: 1, 128>}, {pipeline_mode = #tpu.pipeline_mode<synchronous>, transform_indices = @transform_7, window_bounds = array<i64: 128, 128>}, {pipeline_mode = #tpu.pipeline_mode<synchronous>, transform_indices = @transform_8, window_bounds = array<i64: 1, 128>}, {pipeline_mode = #tpu.pipeline_mode<synchronous>, transform_indices = @transform_9, window_bounds = array<i64: 128, 128>}, {pipeline_mode = #tpu.pipeline_mode<synchronous>, transform_indices = @transform_10, window_bounds = array<i64: 1, 128>}, {transform_indices = @transform_11, window_bounds = array<i64: 8, 128>}]} {
    %c0 = arith.constant 0 : index
    %c0_0 = arith.constant 0 : index
    %0 = vector.load %arg1[%c0, %c0_0] : memref<8x32xf32, #tpu.memory_space<vmem>>, vector<8x32xf32>
    %c0_1 = arith.constant 0 : index
    %c0_2 = arith.constant 0 : index
    %1 = vector.load %arg2[%c0_1, %c0_2] : memref<8x1xi32, #tpu.memory_space<vmem>>, vector<8x1xi32>
    %2 = tpu.iota {dimensions = array<i32: 1>} : vector<8x128xi32>
    %3 = vector.broadcast %1 : vector<8x1xi32> to vector<8x128xi32>
    %4 = arith.cmpi eq, %2, %3 : vector<8x128xi32>
    %c0_3 = arith.constant 0 : index
    %c0_4 = arith.constant 0 : index
    %5 = vector.load %arg3[%c0_3, %c0_4] : memref<32x128xf32, #tpu.memory_space<vmem>>, vector<32x128xf32>
    %cst = arith.constant dense<0.000000e+00> : vector<8x128xf32>
    %6 = tpu.matmul %0, %5, %cst {dimension_numbers = #tpu.dot_dimension_numbers<[1], [0], [0], [1], [0, 0, 1, 1], [], []>} : vector<8x32xf32>, vector<32x128xf32>, vector<8x128xf32> -> vector<8x128xf32>
    %7 = arith.extui %4 : vector<8x128xi1> to vector<8x128xi32>
    %8 = arith.sitofp %7 : vector<8x128xi32> to vector<8x128xf32>
    %c0_5 = arith.constant 0 : index
    %c0_6 = arith.constant 0 : index
    %9 = vector.load %arg4[%c0_5, %c0_6] : memref<128x128xf32, #tpu.memory_space<vmem>>, vector<128x128xf32>
    %cst_7 = arith.constant dense<0.000000e+00> : vector<8x128xf32>
    %10 = tpu.matmul %8, %9, %cst_7 {dimension_numbers = #tpu.dot_dimension_numbers<[1], [0], [0], [1], [0, 0, 1, 1], [], []>} : vector<8x128xf32>, vector<128x128xf32>, vector<8x128xf32> -> vector<8x128xf32>
    %11 = arith.addf %6, %10 : vector<8x128xf32>
    %c0_8 = arith.constant 0 : index
    %c0_9 = arith.constant 0 : index
    %12 = vector.load %arg5[%c0_8, %c0_9] : memref<1x128xf32, #tpu.memory_space<vmem>>, vector<1x128xf32>
    %13 = vector.broadcast %12 : vector<1x128xf32> to vector<8x128xf32>
    %14 = arith.addf %11, %13 : vector<8x128xf32>
    %cst_10 = arith.constant 0.000000e+00 : f32
    %15 = vector.broadcast %cst_10 : f32 to vector<8x128xf32>
    %16 = arith.cmpf ogt, %14, %15 : vector<8x128xf32>
    %cst_11 = arith.constant 2.000000e-01 : f32
    %17 = vector.broadcast %cst_11 : f32 to vector<8x128xf32>
    %18 = arith.mulf %17, %14 : vector<8x128xf32>
    %19 = arith.select %16, %14, %18 : vector<8x128xi1>, vector<8x128xf32>
    %c0_12 = arith.constant 0 : index
    %c0_13 = arith.constant 0 : index
    %20 = vector.load %arg6[%c0_12, %c0_13] : memref<128x128xf32, #tpu.memory_space<vmem>>, vector<128x128xf32>
    %cst_14 = arith.constant dense<0.000000e+00> : vector<8x128xf32>
    %21 = tpu.matmul %19, %20, %cst_14 {dimension_numbers = #tpu.dot_dimension_numbers<[1], [0], [0], [1], [0, 0, 1, 1], [], []>} : vector<8x128xf32>, vector<128x128xf32>, vector<8x128xf32> -> vector<8x128xf32>
    %c0_15 = arith.constant 0 : index
    %c0_16 = arith.constant 0 : index
    %22 = vector.load %arg7[%c0_15, %c0_16] : memref<1x128xf32, #tpu.memory_space<vmem>>, vector<1x128xf32>
    %23 = vector.broadcast %22 : vector<1x128xf32> to vector<8x128xf32>
    %24 = arith.addf %21, %23 : vector<8x128xf32>
    %cst_17 = arith.constant 0.000000e+00 : f32
    %25 = vector.broadcast %cst_17 : f32 to vector<8x128xf32>
    %26 = arith.cmpf ogt, %24, %25 : vector<8x128xf32>
    %cst_18 = arith.constant 2.000000e-01 : f32
    %27 = vector.broadcast %cst_18 : f32 to vector<8x128xf32>
    %28 = arith.mulf %27, %24 : vector<8x128xf32>
    %29 = arith.select %26, %24, %28 : vector<8x128xi1>, vector<8x128xf32>
    %c0_19 = arith.constant 0 : index
    %c0_20 = arith.constant 0 : index
    %30 = vector.load %arg8[%c0_19, %c0_20] : memref<128x128xf32, #tpu.memory_space<vmem>>, vector<128x128xf32>
    %cst_21 = arith.constant dense<0.000000e+00> : vector<8x128xf32>
    %31 = tpu.matmul %29, %30, %cst_21 {dimension_numbers = #tpu.dot_dimension_numbers<[1], [0], [0], [1], [0, 0, 1, 1], [], []>} : vector<8x128xf32>, vector<128x128xf32>, vector<8x128xf32> -> vector<8x128xf32>
    %c0_22 = arith.constant 0 : index
    %c0_23 = arith.constant 0 : index
    %32 = vector.load %arg9[%c0_22, %c0_23] : memref<1x128xf32, #tpu.memory_space<vmem>>, vector<1x128xf32>
    %33 = vector.broadcast %32 : vector<1x128xf32> to vector<8x128xf32>
    %34 = arith.addf %31, %33 : vector<8x128xf32>
    %cst_24 = arith.constant 0.000000e+00 : f32
    %35 = vector.broadcast %cst_24 : f32 to vector<8x128xf32>
    %36 = arith.cmpf ogt, %34, %35 : vector<8x128xf32>
    %cst_25 = arith.constant 2.000000e-01 : f32
    %37 = vector.broadcast %cst_25 : f32 to vector<8x128xf32>
    %38 = arith.mulf %37, %34 : vector<8x128xf32>
    %39 = arith.select %36, %34, %38 : vector<8x128xi1>, vector<8x128xf32>
    %c0_26 = arith.constant 0 : index
    %c0_27 = arith.constant 0 : index
    %40 = vector.load %arg10[%c0_26, %c0_27] : memref<128x128xf32, #tpu.memory_space<vmem>>, vector<128x128xf32>
    %cst_28 = arith.constant dense<0.000000e+00> : vector<8x128xf32>
    %41 = tpu.matmul %39, %40, %cst_28 {dimension_numbers = #tpu.dot_dimension_numbers<[1], [0], [0], [1], [0, 0, 1, 1], [], []>} : vector<8x128xf32>, vector<128x128xf32>, vector<8x128xf32> -> vector<8x128xf32>
    %c0_29 = arith.constant 0 : index
    %c0_30 = arith.constant 0 : index
    %42 = vector.load %arg11[%c0_29, %c0_30] : memref<1x128xf32, #tpu.memory_space<vmem>>, vector<1x128xf32>
    %43 = vector.broadcast %42 : vector<1x128xf32> to vector<8x128xf32>
    %44 = arith.addf %41, %43 : vector<8x128xf32>
    %cst_31 = arith.constant 0.000000e+00 : f32
    %45 = vector.broadcast %cst_31 : f32 to vector<8x128xf32>
    %46 = arith.select %4, %44, %45 : vector<8x128xi1>, vector<8x128xf32>
    %cst_32 = arith.constant dense<0.000000e+00> : vector<8xf32>
    %47 = vector.multi_reduction <add>, %46, %cst_32 [1] : vector<8x128xf32> to vector<8xf32>
    %48 = vector.shape_cast %47 : vector<8xf32> to vector<8x1xf32>
    %49 = vector.shape_cast %48 : vector<8x1xf32> to vector<8x1xf32>
    %50 = vector.broadcast %49 : vector<8x1xf32> to vector<8x128xf32>
    %c0_33 = arith.constant 0 : index
    %c0_34 = arith.constant 0 : index
    %51 = vector.load %arg12[%c0_33, %c0_34] : memref<8x128xf32, #tpu.memory_space<vmem>>, vector<8x128xf32>
    tpu.vector_store %arg12[%c0_33, %c0_34], %50 {strides = array<i32>} : memref<8x128xf32, #tpu.memory_space<vmem>>, vector<8x128xf32>,
    return
  }
  func.func @transform_0(%arg0: i32) -> (i32, i32) {
    %c0_i32 = arith.constant 0 : i32
    %c0_i32_0 = arith.constant 0 : i32
    return %arg0, %c0_i32 : i32, i32
  }
  func.func @transform_1(%arg0: i32) -> (i32, i32) {
    %c0_i32 = arith.constant 0 : i32
    %c0_i32_0 = arith.constant 0 : i32
    return %arg0, %c0_i32 : i32, i32
  }
  func.func @transform_2(%arg0: i32) -> (i32, i32) {
    %c0_i32 = arith.constant 0 : i32
    %c0_i32_0 = arith.constant 0 : i32
    %c0_i32_1 = arith.constant 0 : i32
    return %c0_i32, %c0_i32_0 : i32, i32
  }
  func.func @transform_3(%arg0: i32) -> (i32, i32) {
    %c0_i32 = arith.constant 0 : i32
    %c0_i32_0 = arith.constant 0 : i32
    %c0_i32_1 = arith.constant 0 : i32
    return %c0_i32, %c0_i32_0 : i32, i32
  }
  func.func @transform_4(%arg0: i32) -> (i32, i32) {
    %c0_i32 = arith.constant 0 : i32
    %c0_i32_0 = arith.constant 0 : i32
    %c0_i32_1 = arith.constant 0 : i32
    return %c0_i32, %c0_i32_0 : i32, i32
  }
  func.func @transform_5(%arg0: i32) -> (i32, i32) {
    %c0_i32 = arith.constant 0 : i32
    %c0_i32_0 = arith.constant 0 : i32
    %c0_i32_1 = arith.constant 0 : i32
    return %c0_i32, %c0_i32_0 : i32, i32
  }
  func.func @transform_6(%arg0: i32) -> (i32, i32) {
    %c0_i32 = arith.constant 0 : i32
    %c0_i32_0 = arith.constant 0 : i32
    %c0_i32_1 = arith.constant 0 : i32
    return %c0_i32, %c0_i32_0 : i32, i32
  }
  func.func @transform_7(%arg0: i32) -> (i32, i32) {
    %c0_i32 = arith.constant 0 : i32
    %c0_i32_0 = arith.constant 0 : i32
    %c0_i32_1 = arith.constant 0 : i32
    return %c0_i32, %c0_i32_0 : i32, i32
  }
  func.func @transform_8(%arg0: i32) -> (i32, i32) {
    %c0_i32 = arith.constant 0 : i32
    %c0_i32_0 = arith.constant 0 : i32
    %c0_i32_1 = arith.constant 0 : i32
    return %c0_i32, %c0_i32_0 : i32, i32
  }
  func.func @transform_9(%arg0: i32) -> (i32, i32) {
    %c0_i32 = arith.constant 0 : i32
    %c0_i32_0 = arith.constant 0 : i32
    %c0_i32_1 = arith.constant 0 : i32
    return %c0_i32, %c0_i32_0 : i32, i32
  }
  func.func @transform_10(%arg0: i32) -> (i32, i32) {
    %c0_i32 = arith.constant 0 : i32
    %c0_i32_0 = arith.constant 0 : i32
    %c0_i32_1 = arith.constant 0 : i32
    return %c0_i32, %c0_i32_0 : i32, i32
  }
  func.func @transform_11(%arg0: i32) -> (i32, i32) {
    %c0_i32 = arith.constant 0 : i32
    %c0_i32_0 = arith.constant 0 : i32
    return %arg0, %c0_i32 : i32, i32
  }
}

</mosaic_0001>

<llo_original>
// kernel: tpu_custom_call.1
$region0: #{tpu_custom_call.1}
  #allocation0 [shape = 'u32[]', space=smem, size = 0x4, offset = 0x4, fixed_abs, tag = 'smem constant byte address 0x4 - core index']
  #allocation1 [shape = 'u32[144,128]{1,0:T(1,128)}', space=vmem, size = 0x12000, scoped, tag = 'internal scratch']
  %s0 = inlined_call_operand.vmem [shape: f32[8,32], index: 0, kind: input, shape index: {}]
  %s1 = inlined_call_operand.vmem [shape: s32[8,1], index: 1, kind: input, shape index: {}]
  %s2 = inlined_call_operand.hbm [shape: f32[32,128], index: 2, kind: input, shape index: {}]
  %s3 = inlined_call_operand.hbm [shape: f32[128,128], index: 3, kind: input, shape index: {}]
  %s4 = inlined_call_operand.vmem [shape: f32[1,128], index: 4, kind: input, shape index: {}]
  %s5 = inlined_call_operand.hbm [shape: f32[128,128], index: 5, kind: input, shape index: {}]
  %s6 = inlined_call_operand.vmem [shape: f32[1,128], index: 6, kind: input, shape index: {}]
  %s7 = inlined_call_operand.hbm [shape: f32[128,128], index: 7, kind: input, shape index: {}]
  %s8 = inlined_call_operand.vmem [shape: f32[1,128], index: 8, kind: input, shape index: {}]
  %s9 = inlined_call_operand.hbm [shape: f32[128,128], index: 9, kind: input, shape index: {}]
  %s10 = inlined_call_operand.vmem [shape: f32[1,128], index: 10, kind: input, shape index: {}]
  %s11 = inlined_call_operand.hbm [shape: f32[8,128], index: 11, kind: output, shape index: {}]
  %s12 = sld [smem:[#allocation0]]
  $region74: #{tpu_custom_call.1} parent=0
    _
  %s14 = ssub.s32 1, %s12
  %s15 = scalar_select 0, %s14, %s12
  $region1: #{tpu_custom_call.1} parent=0
    #allocation2 [shape = 'u8[16384]{0}', space=vmem, size = 0x4000, scoped, tag = 'input window, operand 2, single buffered']
    #allocation3 [shape = 's32[1]{0}', space=sflag, size = 0x4, scoped, tag = 'scoped memory for tpu_custom_call.1']
    #allocation4 [shape = 's32[1]{0}', space=sflag, size = 0x4, scoped, tag = 'scoped memory for tpu_custom_call.1']
    #allocation5 [shape = 'u8[65536]{0}', space=vmem, size = 0x10000, scoped, tag = 'input window, operand 3, single buffered']
    #allocation6 [shape = 's32[1]{0}', space=sflag, size = 0x4, scoped, tag = 'scoped memory for tpu_custom_call.1']
    #allocation7 [shape = 'u8[65536]{0}', space=vmem, size = 0x10000, scoped, tag = 'input window, operand 5, single buffered']
    #allocation8 [shape = 'u8[65536]{0}', space=vmem, size = 0x10000, scoped, tag = 'input window, operand 7, single buffered']
    #allocation9 [shape = 's32[1]{0}', space=sflag, size = 0x4, scoped, tag = 'scoped memory for tpu_custom_call.1']
    #allocation10 [shape = 'u8[65536]{0}', space=vmem, size = 0x10000, scoped, tag = 'input window, operand 9, single buffered']
    #allocation11 [shape = 'u8[4096]{0}', space=vmem, size = 0x1000, scoped, tag = 'output window, operand 0, single buffered']
    %16 = vsyncpa [#allocation3], 0
    %17 = vsyncpa [#allocation6], 0
    %18 = vsyncpa [#allocation9], 0
    %19 = vsyncpa [#allocation4], 0
    // Predicated region
    $region2: #{tpu_custom_call.1} parent=1 // pred_check
      _
    $region3: #{tpu_custom_call.1} parent=1 // pred_check_branch
      %21 = sbr.rel (0) target = $region5
    $region4: #{tpu_custom_call.1} parent=1 // pred_region
      _
    $region5: #{tpu_custom_call.1} parent=1 // pred_fallthru
      _
    // Predicated region
    $region6: #{tpu_custom_call.1} parent=1 // pred_check
      _
    $region7: #{tpu_custom_call.1} parent=1 // pred_check_branch
      %23 = sbr.rel (0) target = $region9
    $region8: #{tpu_custom_call.1} parent=1 // pred_region
      _
    $region9: #{tpu_custom_call.1} parent=1 // pred_fallthru
      _
    // Predicated region
    $region10: #{tpu_custom_call.1} parent=1 // pred_check
      _
    $region11: #{tpu_custom_call.1} parent=1 // pred_check_branch
      %25 = sbr.rel (0) target = $region13
    $region12: #{tpu_custom_call.1} parent=1 // pred_region
      %s27 = ssub.s32 512, 512
      %28 = vsyncadd [#allocation3], %s27
      %s29 = sshll.u32 [#allocation2], 4
      %s30 = int_to_ptr.vmem [resolvable:$true] %s29
      %35 = dma.hbm_to_vmem [thread:$0]  %s2, 512, %s30, [#allocation3], 128, 128, 8
    $region13: #{tpu_custom_call.1} parent=1 // pred_fallthru
      _
    // Predicated region
    $region14: #{tpu_custom_call.1} parent=1 // pred_check
      _
    $region15: #{tpu_custom_call.1} parent=1 // pred_check_branch
      %37 = sbr.rel (0) target = $region17
    $region16: #{tpu_custom_call.1} parent=1 // pred_region
      %s39 = ssub.s32 2048, 2048
      %40 = vsyncadd [#allocation6], %s39
      %s41 = sshll.u32 [#allocation5], 4
      %s42 = int_to_ptr.vmem [resolvable:$true] %s41
      %47 = dma.hbm_to_vmem [thread:$0]  %s3, 2048, %s42, [#allocation6], 128, 128, 8
    $region17: #{tpu_custom_call.1} parent=1 // pred_fallthru
      _
    // Predicated region
    $region18: #{tpu_custom_call.1} parent=1 // pred_check
      _
    $region19: #{tpu_custom_call.1} parent=1 // pred_check_branch
      %49 = sbr.rel (0) target = $region21
    $region20: #{tpu_custom_call.1} parent=1 // pred_region
      _
    $region21: #{tpu_custom_call.1} parent=1 // pred_fallthru
      _
    // Predicated region
    $region22: #{tpu_custom_call.1} parent=1 // pred_check
      _
    $region23: #{tpu_custom_call.1} parent=1 // pred_check_branch
      %51 = sbr.rel (0) target = $region25
    $region24: #{tpu_custom_call.1} parent=1 // pred_region
      %s53 = ssub.s32 2048, 2048
      %54 = vsyncadd [#allocation6], %s53
      %s55 = sshll.u32 [#allocation7], 4
      %s56 = int_to_ptr.vmem [resolvable:$true] %s55
      %61 = dma.hbm_to_vmem [thread:$0]  %s5, 2048, %s56, [#allocation6], 128, 128, 8
    $region25: #{tpu_custom_call.1} parent=1 // pred_fallthru
      _
    // Predicated region
    $region26: #{tpu_custom_call.1} parent=1 // pred_check
      _
    $region27: #{tpu_custom_call.1} parent=1 // pred_check_branch
      %63 = sbr.rel (0) target = $region29
    $region28: #{tpu_custom_call.1} parent=1 // pred_region
      _
    $region29: #{tpu_custom_call.1} parent=1 // pred_fallthru
      _
    // Predicated region
    $region30: #{tpu_custom_call.1} parent=1 // pred_check
      _
    $region31: #{tpu_custom_call.1} parent=1 // pred_check_branch
      %65 = sbr.rel (0) target = $region33
    $region32: #{tpu_custom_call.1} parent=1 // pred_region
      %s67 = ssub.s32 2048, 2048
      %68 = vsyncadd [#allocation9], %s67
      %s69 = sshll.u32 [#allocation8], 4
      %s70 = int_to_ptr.vmem [resolvable:$true] %s69
      %75 = dma.hbm_to_vmem [thread:$0]  %s7, 2048, %s70, [#allocation9], 128, 128, 8
    $region33: #{tpu_custom_call.1} parent=1 // pred_fallthru
      _
    // Predicated region
    $region34: #{tpu_custom_call.1} parent=1 // pred_check
      _
    $region35: #{tpu_custom_call.1} parent=1 // pred_check_branch
      %77 = sbr.rel (0) target = $region37
    $region36: #{tpu_custom_call.1} parent=1 // pred_region
      _
    $region37: #{tpu_custom_call.1} parent=1 // pred_fallthru
      _
    // Predicated region
    $region38: #{tpu_custom_call.1} parent=1 // pred_check
      _
    $region39: #{tpu_custom_call.1} parent=1 // pred_check_branch
      %79 = sbr.rel (0) target = $region41
    $region40: #{tpu_custom_call.1} parent=1 // pred_region
      %s81 = ssub.s32 2048, 2048
      %82 = vsyncadd [#allocation9], %s81
      %s83 = sshll.u32 [#allocation10], 4
      %s84 = int_to_ptr.vmem [resolvable:$true] %s83
      %89 = dma.hbm_to_vmem [thread:$0]  %s9, 2048, %s84, [#allocation9], 128, 128, 8
    $region41: #{tpu_custom_call.1} parent=1 // pred_fallthru
      _
    // Predicated region
    $region42: #{tpu_custom_call.1} parent=1 // pred_check
      _
    $region43: #{tpu_custom_call.1} parent=1 // pred_check_branch
      %91 = sbr.rel (0) target = $region45
    $region44: #{tpu_custom_call.1} parent=1 // pred_region
      _
    $region45: #{tpu_custom_call.1} parent=1 // pred_fallthru
      _
    // Predicated region
    $region46: #{tpu_custom_call.1} parent=1 // pred_check
      _
    $region47: #{tpu_custom_call.1} parent=1 // pred_check_branch
      %93 = sbr.rel (0) target = $region49
    $region48: #{tpu_custom_call.1} parent=1 // pred_region
      %94 = dma.done [#allocation3], 512
    $region49: #{tpu_custom_call.1} parent=1 // pred_fallthru
      _
    // Predicated region
    $region50: #{tpu_custom_call.1} parent=1 // pred_check
      _
    $region51: #{tpu_custom_call.1} parent=1 // pred_check_branch
      %96 = sbr.rel (0) target = $region53
    $region52: #{tpu_custom_call.1} parent=1 // pred_region
      %97 = dma.done [#allocation6], 2048
    $region53: #{tpu_custom_call.1} parent=1 // pred_fallthru
      _
    // Predicated region
    $region54: #{tpu_custom_call.1} parent=1 // pred_check
      _
    $region55: #{tpu_custom_call.1} parent=1 // pred_check_branch
      %99 = sbr.rel (0) target = $region57
    $region56: #{tpu_custom_call.1} parent=1 // pred_region
      %100 = dma.done [#allocation6], 2048
    $region57: #{tpu_custom_call.1} parent=1 // pred_fallthru
      _
    // Predicated region
    $region58: #{tpu_custom_call.1} parent=1 // pred_check
      _
    $region59: #{tpu_custom_call.1} parent=1 // pred_check_branch
      %102 = sbr.rel (0) target = $region61
    $region60: #{tpu_custom_call.1} parent=1 // pred_region
      %103 = dma.done [#allocation9], 2048
    $region61: #{tpu_custom_call.1} parent=1 // pred_fallthru
      _
    // Predicated region
    $region62: #{tpu_custom_call.1} parent=1 // pred_check
      _
    $region63: #{tpu_custom_call.1} parent=1 // pred_check_branch
      %105 = sbr.rel (0) target = $region65
    $region64: #{tpu_custom_call.1} parent=1 // pred_region
      %106 = dma.done [#allocation9], 2048
    $region65: #{tpu_custom_call.1} parent=1 // pred_fallthru
      _
    %v107 = vld [vmem:[%s0] sm:$0xff]
    %v108 = vld [vmem:[%s1] sm:$0xff]
    %v109 = vlaneseq
    %v110 = vand.u32 %v109, 127
    %111 = vset.pattern.permute.xlu0 0
    %112 = vperm.xlu0 %111, %v108
    %v113 = vpop.permute.xlu0 %112
    %vm114 = vcmp.eq.s32.totalorder %v110, %v113
    %v115 = vld [vmem:[#allocation2] sm:$0xff]
    %v116 = vld [vmem:[#allocation2 + $0x8] sm:$0xff]
    %v117 = vld [vmem:[#allocation2 + $0x10] sm:$0xff]
    %v118 = vld [vmem:[#allocation2 + $0x18] sm:$0xff]
    %v119 = vsel %vm114, 1, 0
    %v120 = vcvt.s32.f32 %v119
    %v121 = vld [vmem:[#allocation5] sm:$0xff]
    %v122 = vld [vmem:[#allocation5 + $0x8] sm:$0xff]
    %v123 = vld [vmem:[#allocation5 + $0x10] sm:$0xff]
    %v124 = vld [vmem:[#allocation5 + $0x18] sm:$0xff]
    %v125 = vld [vmem:[#allocation5 + $0x20] sm:$0xff]
    %v126 = vld [vmem:[#allocation5 + $0x28] sm:$0xff]
    %v127 = vld [vmem:[#allocation5 + $0x30] sm:$0xff]
    %v128 = vld [vmem:[#allocation5 + $0x38] sm:$0xff]
    %v129 = vld [vmem:[#allocation5 + $0x40] sm:$0xff]
    %v130 = vld [vmem:[#allocation5 + $0x48] sm:$0xff]
    %v131 = vld [vmem:[#allocation5 + $0x50] sm:$0xff]
    %v132 = vld [vmem:[#allocation5 + $0x58] sm:$0xff]
    %v133 = vld [vmem:[#allocation5 + $0x60] sm:$0xff]
    %v134 = vld [vmem:[#allocation5 + $0x68] sm:$0xff]
    %v135 = vld [vmem:[#allocation5 + $0x70] sm:$0xff]
    %v136 = vld [vmem:[#allocation5 + $0x78] sm:$0xff]
    %137 = vmatprep.subr.mxu0 0.0
    %138 = vmatpush1.msra.mxu0 %v121
    %139 = vmatprep.subr.mxu0 0.0
    %140 = vmatpush1.msra.mxu0 %v122
    %141 = vmatprep.subr.mxu0 0.0
    %142 = vmatpush1.msra.mxu0 %v123
    %143 = vmatprep.subr.mxu0 0.0
    %144 = vmatpush1.msra.mxu0 %v124
    %145 = vmatprep.subr.mxu0 0.0
    %146 = vmatpush1.msra.mxu0 %v125
    %147 = vmatprep.subr.mxu0 0.0
    %148 = vmatpush1.msra.mxu0 %v126
    %149 = vmatprep.subr.mxu0 0.0
    %150 = vmatpush1.msra.mxu0 %v127
    %151 = vmatprep.subr.mxu0 0.0
    %152 = vmatpush1.msra.mxu0 %v128
    %153 = vmatprep.subr.mxu0 0.0
    %154 = vmatpush1.msra.mxu0 %v129
    %155 = vmatprep.subr.mxu0 0.0
    %156 = vmatpush1.msra.mxu0 %v130
    %157 = vmatprep.subr.mxu0 0.0
    %158 = vmatpush1.msra.mxu0 %v131
    %159 = vmatprep.subr.mxu0 0.0
    %160 = vmatpush1.msra.mxu0 %v132
    %161 = vmatprep.subr.mxu0 0.0
    %162 = vmatpush1.msra.mxu0 %v133
    %163 = vmatprep.subr.mxu0 0.0
    %164 = vmatpush1.msra.mxu0 %v134
    %165 = vmatprep.subr.mxu0 0.0
    %166 = vmatpush1.msra.mxu0 %v135
    %167 = vmatprep.subr.mxu0 0.0
    %168 = vmatpush1.msra.mxu0 %v136
    %169 = vmatprep.subr.mxu0 0.0
    %170 = vmatpush1.msra.mxu0 0.0
    %171 = vmatprep.subr.mxu0 0.0
    %172 = vmatpush1.msra.mxu0 0.0
    %173 = vmatprep.subr.mxu0 0.0
    %174 = vmatpush1.msra.mxu0 0.0
    %175 = vmatprep.subr.mxu0 0.0
    %176 = vmatpush1.msra.mxu0 0.0
    %177 = vmatprep.subr.mxu0 0.0
    %178 = vmatpush1.msra.mxu0 0.0
    %179 = vmatprep.subr.mxu0 0.0
    %180 = vmatpush1.msra.mxu0 0.0
    %181 = vmatprep.subr.mxu0 0.0
    %182 = vmatpush1.msra.mxu0 0.0
    %183 = vmatprep.subr.mxu0 0.0
    %184 = vmatpush1.msra.mxu0 0.0
    %185 = vmatprep.subr.mxu0 0.0
    %186 = vmatpush1.msra.mxu0 0.0
    %187 = vmatprep.subr.mxu0 0.0
    %188 = vmatpush1.msra.mxu0 0.0
    %189 = vmatprep.subr.mxu0 0.0
    %190 = vmatpush1.msra.mxu0 0.0
    %191 = vmatprep.subr.mxu0 0.0
    %192 = vmatpush1.msra.mxu0 0.0
    %193 = vmatprep.subr.mxu0 0.0
    %194 = vmatpush1.msra.mxu0 0.0
    %195 = vmatprep.subr.mxu0 0.0
    %196 = vmatpush1.msra.mxu0 0.0
    %197 = vmatprep.subr.mxu0 0.0
    %198 = vmatpush1.msra.mxu0 0.0
    %199 = vmatprep.subr.mxu0 0.0
    %200 = vmatpush1.msra.mxu0 0.0
    %201 = vmatprep.mubr.f32.mxu0 0.0
    %202 = vmatmul.mubr.f32.gmra.mrb[0].mxu0 %v120
    %v203 = vpop.f32.mrb[0].mxu0
    %v204 = vadd.f32 0.0, %v203
    %v205 = vpop.f32.mrb[0].mxu0
    %206 = vdwg.mxu0
    %vm207 = vcmask 261120
    %v209 = vsel %vm207, %v107, 0
    %211 = vmatprep.subr.mxu0 0.0
    %212 = vmatpush1.msra.mxu0 %v115
    %213 = vmatprep.subr.mxu0 0.0
    %214 = vmatpush1.msra.mxu0 %v116
    %215 = vmatprep.subr.mxu0 0.0
    %216 = vmatpush1.msra.mxu0 %v117
    %217 = vmatprep.subr.mxu0 0.0
    %218 = vmatpush1.msra.mxu0 %v118
    %219 = vmatprep.subr.mxu0 0.0
    %220 = vmatpush1.msra.mxu0 0.0
    %221 = vmatprep.subr.mxu0 0.0
    %222 = vmatpush1.msra.mxu0 0.0
    %223 = vmatprep.subr.mxu0 0.0
    %224 = vmatpush1.msra.mxu0 0.0
    %225 = vmatprep.subr.mxu0 0.0
    %226 = vmatpush1.msra.mxu0 0.0
    %227 = vmatprep.subr.mxu0 0.0
    %228 = vmatpush1.msra.mxu0 0.0
    %229 = vmatprep.subr.mxu0 0.0
    %230 = vmatpush1.msra.mxu0 0.0
    %231 = vmatprep.subr.mxu0 0.0
    %232 = vmatpush1.msra.mxu0 0.0
    %233 = vmatprep.subr.mxu0 0.0
    %234 = vmatpush1.msra.mxu0 0.0
    %235 = vmatprep.subr.mxu0 0.0
    %236 = vmatpush1.msra.mxu0 0.0
    %237 = vmatprep.subr.mxu0 0.0
    %238 = vmatpush1.msra.mxu0 0.0
    %239 = vmatprep.subr.mxu0 0.0
    %240 = vmatpush1.msra.mxu0 0.0
    %241 = vmatprep.subr.mxu0 0.0
    %242 = vmatpush1.msra.mxu0 0.0
    %243 = vmatprep.subr.mxu0 0.0
    %244 = vmatpush1.msra.mxu0 0.0
    %245 = vmatprep.subr.mxu0 0.0
    %246 = vmatpush1.msra.mxu0 0.0
    %247 = vmatprep.subr.mxu0 0.0
    %248 = vmatpush1.msra.mxu0 0.0
    %249 = vmatprep.subr.mxu0 0.0
    %250 = vmatpush1.msra.mxu0 0.0
    %251 = vmatprep.subr.mxu0 0.0
    %252 = vmatpush1.msra.mxu0 0.0
    %253 = vmatprep.subr.mxu0 0.0
    %254 = vmatpush1.msra.mxu0 0.0
    %255 = vmatprep.subr.mxu0 0.0
    %256 = vmatpush1.msra.mxu0 0.0
    %257 = vmatprep.subr.mxu0 0.0
    %258 = vmatpush1.msra.mxu0 0.0
    %259 = vmatprep.subr.mxu0 0.0
    %260 = vmatpush1.msra.mxu0 0.0
    %261 = vmatprep.subr.mxu0 0.0
    %262 = vmatpush1.msra.mxu0 0.0
    %263 = vmatprep.subr.mxu0 0.0
    %264 = vmatpush1.msra.mxu0 0.0
    %265 = vmatprep.subr.mxu0 0.0
    %266 = vmatpush1.msra.mxu0 0.0
    %267 = vmatprep.subr.mxu0 0.0
    %268 = vmatpush1.msra.mxu0 0.0
    %269 = vmatprep.subr.mxu0 0.0
    %270 = vmatpush1.msra.mxu0 0.0
    %271 = vmatprep.subr.mxu0 0.0
    %272 = vmatpush1.msra.mxu0 0.0
    %273 = vmatprep.subr.mxu0 0.0
    %274 = vmatpush1.msra.mxu0 0.0
    %275 = vmatprep.mubr.f32.mxu0 0.0
    %276 = vmatmul.mubr.f32.gmra.mrb[0].mxu0 %v209
    %v277 = vpop.f32.mrb[0].mxu0
    %v278 = vadd.f32 %v204, %v277
    %v279 = vpop.f32.mrb[0].mxu0
    %280 = vdwg.mxu0
    %v281 = vld [vmem:[%s4] sm:$0x1]
    %v283 = vlaneseq
    %v284 = vshrl.u32 %v283, 7
    %v285 = vsub.s32 0, %v284
    %v286 = vrot.slane %v281, %v285
    %v288 = vadd.f32 %v278, %v286
    %vm289 = vcmp.gt.f32.partialorder %v288, 0.0
    %v290 = vmul.f32 %v288, 0.2
    %v291 = vsel %vm289, %v288, %v290
    %v292 = vld [vmem:[#allocation7] sm:$0xff]
    %v293 = vld [vmem:[#allocation7 + $0x8] sm:$0xff]
    %v294 = vld [vmem:[#allocation7 + $0x10] sm:$0xff]
    %v295 = vld [vmem:[#allocation7 + $0x18] sm:$0xff]
    %v296 = vld [vmem:[#allocation7 + $0x20] sm:$0xff]
    %v297 = vld [vmem:[#allocation7 + $0x28] sm:$0xff]
    %v298 = vld [vmem:[#allocation7 + $0x30] sm:$0xff]
    %v299 = vld [vmem:[#allocation7 + $0x38] sm:$0xff]
    %v300 = vld [vmem:[#allocation7 + $0x40] sm:$0xff]
    %v301 = vld [vmem:[#allocation7 + $0x48] sm:$0xff]
    %v302 = vld [vmem:[#allocation7 + $0x50] sm:$0xff]
    %v303 = vld [vmem:[#allocation7 + $0x58] sm:$0xff]
    %v304 = vld [vmem:[#allocation7 + $0x60] sm:$0xff]
    %v305 = vld [vmem:[#allocation7 + $0x68] sm:$0xff]
    %v306 = vld [vmem:[#allocation7 + $0x70] sm:$0xff]
    %v307 = vld [vmem:[#allocation7 + $0x78] sm:$0xff]
    %v308 = vld [vmem:[%s6] sm:$0x1]
    %v310 = vlaneseq
    %v311 = vshrl.u32 %v310, 7
    %v312 = vsub.s32 0, %v311
    %v313 = vrot.slane %v308, %v312
    %315 = vmatprep.subr.mxu0 0.0
    %316 = vmatpush1.msra.mxu0 %v292
    %317 = vmatprep.subr.mxu0 0.0
    %318 = vmatpush1.msra.mxu0 %v293
    %319 = vmatprep.subr.mxu0 0.0
    %320 = vmatpush1.msra.mxu0 %v294
    %321 = vmatprep.subr.mxu0 0.0
    %322 = vmatpush1.msra.mxu0 %v295
    %323 = vmatprep.subr.mxu0 0.0
    %324 = vmatpush1.msra.mxu0 %v296
    %325 = vmatprep.subr.mxu0 0.0
    %326 = vmatpush1.msra.mxu0 %v297
    %327 = vmatprep.subr.mxu0 0.0
    %328 = vmatpush1.msra.mxu0 %v298
    %329 = vmatprep.subr.mxu0 0.0
    %330 = vmatpush1.msra.mxu0 %v299
    %331 = vmatprep.subr.mxu0 0.0
    %332 = vmatpush1.msra.mxu0 %v300
    %333 = vmatprep.subr.mxu0 0.0
    %334 = vmatpush1.msra.mxu0 %v301
    %335 = vmatprep.subr.mxu0 0.0
    %336 = vmatpush1.msra.mxu0 %v302
    %337 = vmatprep.subr.mxu0 0.0
    %338 = vmatpush1.msra.mxu0 %v303
    %339 = vmatprep.subr.mxu0 0.0
    %340 = vmatpush1.msra.mxu0 %v304
    %341 = vmatprep.subr.mxu0 0.0
    %342 = vmatpush1.msra.mxu0 %v305
    %343 = vmatprep.subr.mxu0 0.0
    %344 = vmatpush1.msra.mxu0 %v306
    %345 = vmatprep.subr.mxu0 0.0
    %346 = vmatpush1.msra.mxu0 %v307
    %347 = vmatprep.subr.mxu0 0.0
    %348 = vmatpush1.msra.mxu0 0.0
    %349 = vmatprep.subr.mxu0 0.0
    %350 = vmatpush1.msra.mxu0 0.0
    %351 = vmatprep.subr.mxu0 0.0
    %352 = vmatpush1.msra.mxu0 0.0
    %353 = vmatprep.subr.mxu0 0.0
    %354 = vmatpush1.msra.mxu0 0.0
    %355 = vmatprep.subr.mxu0 0.0
    %356 = vmatpush1.msra.mxu0 0.0
    %357 = vmatprep.subr.mxu0 0.0
    %358 = vmatpush1.msra.mxu0 0.0
    %359 = vmatprep.subr.mxu0 0.0
    %360 = vmatpush1.msra.mxu0 0.0
    %361 = vmatprep.subr.mxu0 0.0
    %362 = vmatpush1.msra.mxu0 0.0
    %363 = vmatprep.subr.mxu0 0.0
    %364 = vmatpush1.msra.mxu0 0.0
    %365 = vmatprep.subr.mxu0 0.0
    %366 = vmatpush1.msra.mxu0 0.0
    %367 = vmatprep.subr.mxu0 0.0
    %368 = vmatpush1.msra.mxu0 0.0
    %369 = vmatprep.subr.mxu0 0.0
    %370 = vmatpush1.msra.mxu0 0.0
    %371 = vmatprep.subr.mxu0 0.0
    %372 = vmatpush1.msra.mxu0 0.0
    %373 = vmatprep.subr.mxu0 0.0
    %374 = vmatpush1.msra.mxu0 0.0
    %375 = vmatprep.subr.mxu0 0.0
    %376 = vmatpush1.msra.mxu0 0.0
    %377 = vmatprep.subr.mxu0 0.0
    %378 = vmatpush1.msra.mxu0 0.0
    %379 = vmatprep.mubr.f32.mxu0 0.0
    %380 = vmatmul.mubr.f32.gmra.mrb[0].mxu0 %v291
    %v381 = vpop.f32.mrb[0].mxu0
    %v382 = vadd.f32 %v313, %v381
    %v383 = vpop.f32.mrb[0].mxu0
    %384 = vdwg.mxu0
    %vm385 = vcmp.gt.f32.partialorder %v382, 0.0
    %v386 = vmul.f32 %v382, 0.2
    %v387 = vsel %vm385, %v382, %v386
    %v388 = vld [vmem:[#allocation8] sm:$0xff]
    %v389 = vld [vmem:[#allocation8 + $0x8] sm:$0xff]
    %v390 = vld [vmem:[#allocation8 + $0x10] sm:$0xff]
    %v391 = vld [vmem:[#allocation8 + $0x18] sm:$0xff]
    %v392 = vld [vmem:[#allocation8 + $0x20] sm:$0xff]
    %v393 = vld [vmem:[#allocation8 + $0x28] sm:$0xff]
    %v394 = vld [vmem:[#allocation8 + $0x30] sm:$0xff]
    %v395 = vld [vmem:[#allocation8 + $0x38] sm:$0xff]
    %v396 = vld [vmem:[#allocation8 + $0x40] sm:$0xff]
    %v397 = vld [vmem:[#allocation8 + $0x48] sm:$0xff]
    %v398 = vld [vmem:[#allocation8 + $0x50] sm:$0xff]
    %v399 = vld [vmem:[#allocation8 + $0x58] sm:$0xff]
    %v400 = vld [vmem:[#allocation8 + $0x60] sm:$0xff]
    %v401 = vld [vmem:[#allocation8 + $0x68] sm:$0xff]
    %v402 = vld [vmem:[#allocation8 + $0x70] sm:$0xff]
    %v403 = vld [vmem:[#allocation8 + $0x78] sm:$0xff]
    %v404 = vld [vmem:[%s8] sm:$0x1]
    %v406 = vlaneseq
    %v407 = vshrl.u32 %v406, 7
    %v408 = vsub.s32 0, %v407
    %v409 = vrot.slane %v404, %v408
    %411 = vmatprep.subr.mxu0 0.0
    %412 = vmatpush1.msra.mxu0 %v388
    %413 = vmatprep.subr.mxu0 0.0
    %414 = vmatpush1.msra.mxu0 %v389
    %415 = vmatprep.subr.mxu0 0.0
    %416 = vmatpush1.msra.mxu0 %v390
    %417 = vmatprep.subr.mxu0 0.0
    %418 = vmatpush1.msra.mxu0 %v391
    %419 = vmatprep.subr.mxu0 0.0
    %420 = vmatpush1.msra.mxu0 %v392
    %421 = vmatprep.subr.mxu0 0.0
    %422 = vmatpush1.msra.mxu0 %v393
    %423 = vmatprep.subr.mxu0 0.0
    %424 = vmatpush1.msra.mxu0 %v394
    %425 = vmatprep.subr.mxu0 0.0
    %426 = vmatpush1.msra.mxu0 %v395
    %427 = vmatprep.subr.mxu0 0.0
    %428 = vmatpush1.msra.mxu0 %v396
    %429 = vmatprep.subr.mxu0 0.0
    %430 = vmatpush1.msra.mxu0 %v397
    %431 = vmatprep.subr.mxu0 0.0
    %432 = vmatpush1.msra.mxu0 %v398
    %433 = vmatprep.subr.mxu0 0.0
    %434 = vmatpush1.msra.mxu0 %v399
    %435 = vmatprep.subr.mxu0 0.0
    %436 = vmatpush1.msra.mxu0 %v400
    %437 = vmatprep.subr.mxu0 0.0
    %438 = vmatpush1.msra.mxu0 %v401
    %439 = vmatprep.subr.mxu0 0.0
    %440 = vmatpush1.msra.mxu0 %v402
    %441 = vmatprep.subr.mxu0 0.0
    %442 = vmatpush1.msra.mxu0 %v403
    %443 = vmatprep.subr.mxu0 0.0
    %444 = vmatpush1.msra.mxu0 0.0
    %445 = vmatprep.subr.mxu0 0.0
    %446 = vmatpush1.msra.mxu0 0.0
    %447 = vmatprep.subr.mxu0 0.0
    %448 = vmatpush1.msra.mxu0 0.0
    %449 = vmatprep.subr.mxu0 0.0
    %450 = vmatpush1.msra.mxu0 0.0
    %451 = vmatprep.subr.mxu0 0.0
    %452 = vmatpush1.msra.mxu0 0.0
    %453 = vmatprep.subr.mxu0 0.0
    %454 = vmatpush1.msra.mxu0 0.0
    %455 = vmatprep.subr.mxu0 0.0
    %456 = vmatpush1.msra.mxu0 0.0
    %457 = vmatprep.subr.mxu0 0.0
    %458 = vmatpush1.msra.mxu0 0.0
    %459 = vmatprep.subr.mxu0 0.0
    %460 = vmatpush1.msra.mxu0 0.0
    %461 = vmatprep.subr.mxu0 0.0
    %462 = vmatpush1.msra.mxu0 0.0
    %463 = vmatprep.subr.mxu0 0.0
    %464 = vmatpush1.msra.mxu0 0.0
    %465 = vmatprep.subr.mxu0 0.0
    %466 = vmatpush1.msra.mxu0 0.0
    %467 = vmatprep.subr.mxu0 0.0
    %468 = vmatpush1.msra.mxu0 0.0
    %469 = vmatprep.subr.mxu0 0.0
    %470 = vmatpush1.msra.mxu0 0.0
    %471 = vmatprep.subr.mxu0 0.0
    %472 = vmatpush1.msra.mxu0 0.0
    %473 = vmatprep.subr.mxu0 0.0
    %474 = vmatpush1.msra.mxu0 0.0
    %475 = vmatprep.mubr.f32.mxu0 0.0
    %476 = vmatmul.mubr.f32.gmra.mrb[0].mxu0 %v387
    %v477 = vpop.f32.mrb[0].mxu0
    %v478 = vadd.f32 %v409, %v477
    %v479 = vpop.f32.mrb[0].mxu0
    %480 = vdwg.mxu0
    %vm481 = vcmp.gt.f32.partialorder %v478, 0.0
    %v482 = vmul.f32 %v478, 0.2
    %v483 = vsel %vm481, %v478, %v482
    %v484 = vld [vmem:[#allocation10] sm:$0xff]
    %v485 = vld [vmem:[#allocation10 + $0x8] sm:$0xff]
    %v486 = vld [vmem:[#allocation10 + $0x10] sm:$0xff]
    %v487 = vld [vmem:[#allocation10 + $0x18] sm:$0xff]
    %v488 = vld [vmem:[#allocation10 + $0x20] sm:$0xff]
    %v489 = vld [vmem:[#allocation10 + $0x28] sm:$0xff]
    %v490 = vld [vmem:[#allocation10 + $0x30] sm:$0xff]
    %v491 = vld [vmem:[#allocation10 + $0x38] sm:$0xff]
    %v492 = vld [vmem:[#allocation10 + $0x40] sm:$0xff]
    %v493 = vld [vmem:[#allocation10 + $0x48] sm:$0xff]
    %v494 = vld [vmem:[#allocation10 + $0x50] sm:$0xff]
    %v495 = vld [vmem:[#allocation10 + $0x58] sm:$0xff]
    %v496 = vld [vmem:[#allocation10 + $0x60] sm:$0xff]
    %v497 = vld [vmem:[#allocation10 + $0x68] sm:$0xff]
    %v498 = vld [vmem:[#allocation10 + $0x70] sm:$0xff]
    %v499 = vld [vmem:[#allocation10 + $0x78] sm:$0xff]
    %v500 = vld [vmem:[%s10] sm:$0x1]
    %v502 = vlaneseq
    %v503 = vshrl.u32 %v502, 7
    %v504 = vsub.s32 0, %v503
    %v505 = vrot.slane %v500, %v504
    %507 = vmatprep.subr.mxu0 0.0
    %508 = vmatpush1.msra.mxu0 %v484
    %509 = vmatprep.subr.mxu0 0.0
    %510 = vmatpush1.msra.mxu0 %v485
    %511 = vmatprep.subr.mxu0 0.0
    %512 = vmatpush1.msra.mxu0 %v486
    %513 = vmatprep.subr.mxu0 0.0
    %514 = vmatpush1.msra.mxu0 %v487
    %515 = vmatprep.subr.mxu0 0.0
    %516 = vmatpush1.msra.mxu0 %v488
    %517 = vmatprep.subr.mxu0 0.0
    %518 = vmatpush1.msra.mxu0 %v489
    %519 = vmatprep.subr.mxu0 0.0
    %520 = vmatpush1.msra.mxu0 %v490
    %521 = vmatprep.subr.mxu0 0.0
    %522 = vmatpush1.msra.mxu0 %v491
    %523 = vmatprep.subr.mxu0 0.0
    %524 = vmatpush1.msra.mxu0 %v492
    %525 = vmatprep.subr.mxu0 0.0
    %526 = vmatpush1.msra.mxu0 %v493
    %527 = vmatprep.subr.mxu0 0.0
    %528 = vmatpush1.msra.mxu0 %v494
    %529 = vmatprep.subr.mxu0 0.0
    %530 = vmatpush1.msra.mxu0 %v495
    %531 = vmatprep.subr.mxu0 0.0
    %532 = vmatpush1.msra.mxu0 %v496
    %533 = vmatprep.subr.mxu0 0.0
    %534 = vmatpush1.msra.mxu0 %v497
    %535 = vmatprep.subr.mxu0 0.0
    %536 = vmatpush1.msra.mxu0 %v498
    %537 = vmatprep.subr.mxu0 0.0
    %538 = vmatpush1.msra.mxu0 %v499
    %539 = vmatprep.subr.mxu0 0.0
    %540 = vmatpush1.msra.mxu0 0.0
    %541 = vmatprep.subr.mxu0 0.0
    %542 = vmatpush1.msra.mxu0 0.0
    %543 = vmatprep.subr.mxu0 0.0
    %544 = vmatpush1.msra.mxu0 0.0
    %545 = vmatprep.subr.mxu0 0.0
    %546 = vmatpush1.msra.mxu0 0.0
    %547 = vmatprep.subr.mxu0 0.0
    %548 = vmatpush1.msra.mxu0 0.0
    %549 = vmatprep.subr.mxu0 0.0
    %550 = vmatpush1.msra.mxu0 0.0
    %551 = vmatprep.subr.mxu0 0.0
    %552 = vmatpush1.msra.mxu0 0.0
    %553 = vmatprep.subr.mxu0 0.0
    %554 = vmatpush1.msra.mxu0 0.0
    %555 = vmatprep.subr.mxu0 0.0
    %556 = vmatpush1.msra.mxu0 0.0
    %557 = vmatprep.subr.mxu0 0.0
    %558 = vmatpush1.msra.mxu0 0.0
    %559 = vmatprep.subr.mxu0 0.0
    %560 = vmatpush1.msra.mxu0 0.0
    %561 = vmatprep.subr.mxu0 0.0
    %562 = vmatpush1.msra.mxu0 0.0
    %563 = vmatprep.subr.mxu0 0.0
    %564 = vmatpush1.msra.mxu0 0.0
    %565 = vmatprep.subr.mxu0 0.0
    %566 = vmatpush1.msra.mxu0 0.0
    %567 = vmatprep.subr.mxu0 0.0
    %568 = vmatpush1.msra.mxu0 0.0
    %569 = vmatprep.subr.mxu0 0.0
    %570 = vmatpush1.msra.mxu0 0.0
    %571 = vmatprep.mubr.f32.mxu0 0.0
    %572 = vmatmul.mubr.f32.gmra.mrb[0].mxu0 %v483
    %v573 = vpop.f32.mrb[0].mxu0
    %v574 = vadd.f32 %v505, %v573
    %v575 = vpop.f32.mrb[0].mxu0
    %576 = vdwg.mxu0
    %v577 = vsel %vm114, %v574, 0.0
    %578 = vadd.xlane.f32.xlu0 %v577
    %v579 = vpop.xlane.xlu0 %578
    %580 = vst [vmem:[#allocation11] sm:$0xff] %v579
    // Predicated region
    $region66: #{tpu_custom_call.1} parent=1 // pred_check
      _
    $region67: #{tpu_custom_call.1} parent=1 // pred_check_branch
      %582 = sbr.rel (0) target = $region69
    $region68: #{tpu_custom_call.1} parent=1 // pred_region
      %s584 = ssub.s32 128, 128
      %585 = vsyncadd [#allocation4], %s584
      %s587 = sshll.u32 [#allocation11], 4
      %s588 = int_to_ptr.vmem [resolvable:$true] %s587
      %590 = dma.vmem_to_hbm [thread:$0]  %s588, 128, %s11, [#allocation4]
    $region69: #{tpu_custom_call.1} parent=1 // pred_fallthru
      _
    // Predicated region
    $region70: #{tpu_custom_call.1} parent=1 // pred_check
      _
    $region71: #{tpu_custom_call.1} parent=1 // pred_check_branch
      %592 = sbr.rel (0) target = $region73
    $region72: #{tpu_custom_call.1} parent=1 // pred_region
      %593 = dma.done [#allocation4], 128
    $region73: #{tpu_custom_call.1} parent=1 // pred_fallthru
      _
    %594 = vsyncpa [#allocation3], 1
    %595 = vsyncpa [#allocation6], 1
    %596 = vsyncpa [#allocation9], 1
    %597 = vsyncpa [#allocation4], 1

// kernel: tpu_custom_call.1
$region0: #{tpu_custom_call.1}
  #allocation0 [shape = 'u32[]', space=smem, size = 0x4, offset = 0x4, fixed_abs, tag = 'smem constant byte address 0x4 - core index']
  #allocation1 [shape = 'u32[144,128]{1,0:T(1,128)}', space=vmem, size = 0x12000, scoped, tag = 'internal scratch']
  %s0 = inlined_call_operand.vmem [shape: f32[8,32], index: 0, kind: input, shape index: {}]
  %s1 = inlined_call_operand.vmem [shape: s32[8,1], index: 1, kind: input, shape index: {}]
  %s2 = inlined_call_operand.hbm [shape: f32[32,128], index: 2, kind: input, shape index: {}]
  %s3 = inlined_call_operand.hbm [shape: f32[128,128], index: 3, kind: input, shape index: {}]
  %s4 = inlined_call_operand.vmem [shape: f32[1,128], index: 4, kind: input, shape index: {}]
  %s5 = inlined_call_operand.hbm [shape: f32[128,128], index: 5, kind: input, shape index: {}]
  %s6 = inlined_call_operand.vmem [shape: f32[1,128], index: 6, kind: input, shape index: {}]
  %s7 = inlined_call_operand.hbm [shape: f32[128,128], index: 7, kind: input, shape index: {}]
  %s8 = inlined_call_operand.vmem [shape: f32[1,128], index: 8, kind: input, shape index: {}]
  %s9 = inlined_call_operand.hbm [shape: f32[128,128], index: 9, kind: input, shape index: {}]
  %s10 = inlined_call_operand.vmem [shape: f32[1,128], index: 10, kind: input, shape index: {}]
  %s11 = inlined_call_operand.hbm [shape: f32[8,128], index: 11, kind: output, shape index: {}]
  %s12 = sld [smem:[#allocation0]]
  $region74: #{tpu_custom_call.1} parent=0
    _
  %s14 = ssub.s32 1, %s12
  %s15 = scalar_select 0, %s14, %s12
  $region1: #{tpu_custom_call.1} parent=0
    #allocation2 [shape = 'u8[16384]{0}', space=vmem, size = 0x4000, scoped, tag = 'input window, operand 2, single buffered']
    #allocation3 [shape = 's32[1]{0}', space=sflag, size = 0x4, scoped, tag = 'scoped memory for tpu_custom_call.1']
    #allocation4 [shape = 's32[1]{0}', space=sflag, size = 0x4, scoped, tag = 'scoped memory for tpu_custom_call.1']
    #allocation5 [shape = 'u8[65536]{0}', space=vmem, size = 0x10000, scoped, tag = 'input window, operand 3, single buffered']
    #allocation6 [shape = 's32[1]{0}', space=sflag, size = 0x4, scoped, tag = 'scoped memory for tpu_custom_call.1']
    #allocation7 [shape = 'u8[65536]{0}', space=vmem, size = 0x10000, scoped, tag = 'input window, operand 5, single buffered']
    #allocation8 [shape = 'u8[65536]{0}', space=vmem, size = 0x10000, scoped, tag = 'input window, operand 7, single buffered']
    #allocation9 [shape = 's32[1]{0}', space=sflag, size = 0x4, scoped, tag = 'scoped memory for tpu_custom_call.1']
    #allocation10 [shape = 'u8[65536]{0}', space=vmem, size = 0x10000, scoped, tag = 'input window, operand 9, single buffered']
    #allocation11 [shape = 'u8[4096]{0}', space=vmem, size = 0x1000, scoped, tag = 'output window, operand 0, single buffered']
    %16 = vsyncpa [#allocation3], 0
    %17 = vsyncpa [#allocation6], 0
    %18 = vsyncpa [#allocation9], 0
    %19 = vsyncpa [#allocation4], 0
    // Predicated region
    $region2: #{tpu_custom_call.1} parent=1 // pred_check
      _
    $region3: #{tpu_custom_call.1} parent=1 // pred_check_branch
      %21 = sbr.rel (0) target = $region5
    $region4: #{tpu_custom_call.1} parent=1 // pred_region
      _
    $region5: #{tpu_custom_call.1} parent=1 // pred_fallthru
      _
    // Predicated region
    $region6: #{tpu_custom_call.1} parent=1 // pred_check
      _
    $region7: #{tpu_custom_call.1} parent=1 // pred_check_branch
      %23 = sbr.rel (0) target = $region9
    $region8: #{tpu_custom_call.1} parent=1 // pred_region
      _
    $region9: #{tpu_custom_call.1} parent=1 // pred_fallthru
      _
    // Predicated region
    $region10: #{tpu_custom_call.1} parent=1 // pred_check
      _
    $region11: #{tpu_custom_call.1} parent=1 // pred_check_branch
      %25 = sbr.rel (0) target = $region13
    $region12: #{tpu_custom_call.1} parent=1 // pred_region
      %s27 = ssub.s32 512, 512
      %28 = vsyncadd [#allocation3], %s27
      %s29 = sshll.u32 [#allocation2], 4
      %s30 = int_to_ptr.vmem [resolvable:$true] %s29
      %35 = dma.hbm_to_vmem [thread:$0]  %s2, 512, %s30, [#allocation3], 128, 128, 8
    $region13: #{tpu_custom_call.1} parent=1 // pred_fallthru
      _
    // Predicated region
    $region14: #{tpu_custom_call.1} parent=1 // pred_check
      _
    $region15: #{tpu_custom_call.1} parent=1 // pred_check_branch
      %37 = sbr.rel (0) target = $region17
    $region16: #{tpu_custom_call.1} parent=1 // pred_region
      %s39 = ssub.s32 2048, 2048
      %40 = vsyncadd [#allocation6], %s39
      %s41 = sshll.u32 [#allocation5], 4
      %s42 = int_to_ptr.vmem [resolvable:$true] %s41
      %47 = dma.hbm_to_vmem [thread:$0]  %s3, 2048, %s42, [#allocation6], 128, 128, 8
    $region17: #{tpu_custom_call.1} parent=1 // pred_fallthru
      _
    // Predicated region
    $region18: #{tpu_custom_call.1} parent=1 // pred_check
      _
    $region19: #{tpu_custom_call.1} parent=1 // pred_check_branch
      %49 = sbr.rel (0) target = $region21
    $region20: #{tpu_custom_call.1} parent=1 // pred_region
      _
    $region21: #{tpu_custom_call.1} parent=1 // pred_fallthru
      _
    // Predicated region
    $region22: #{tpu_custom_call.1} parent=1 // pred_check
      _
    $region23: #{tpu_custom_call.1} parent=1 // pred_check_branch
      %51 = sbr.rel (0) target = $region25
    $region24: #{tpu_custom_call.1} parent=1 // pred_region
      %s53 = ssub.s32 2048, 2048
      %54 = vsyncadd [#allocation6], %s53
      %s55 = sshll.u32 [#allocation7], 4
      %s56 = int_to_ptr.vmem [resolvable:$true] %s55
      %61 = dma.hbm_to_vmem [thread:$0]  %s5, 2048, %s56, [#allocation6], 128, 128, 8
    $region25: #{tpu_custom_call.1} parent=1 // pred_fallthru
      _
    // Predicated region
    $region26: #{tpu_custom_call.1} parent=1 // pred_check
      _
    $region27: #{tpu_custom_call.1} parent=1 // pred_check_branch
      %63 = sbr.rel (0) target = $region29
    $region28: #{tpu_custom_call.1} parent=1 // pred_region
      _
    $region29: #{tpu_custom_call.1} parent=1 // pred_fallthru
      _
    // Predicated region
    $region30: #{tpu_custom_call.1} parent=1 // pred_check
      _
    $region31: #{tpu_custom_call.1} parent=1 // pred_check_branch
      %65 = sbr.rel (0) target = $region33
    $region32: #{tpu_custom_call.1} parent=1 // pred_region
      %s67 = ssub.s32 2048, 2048
      %68 = vsyncadd [#allocation9], %s67
      %s69 = sshll.u32 [#allocation8], 4
      %s70 = int_to_ptr.vmem [resolvable:$true] %s69
      %75 = dma.hbm_to_vmem [thread:$0]  %s7, 2048, %s70, [#allocation9], 128, 128, 8
    $region33: #{tpu_custom_call.1} parent=1 // pred_fallthru
      _
    // Predicated region
    $region34: #{tpu_custom_call.1} parent=1 // pred_check
      _
    $region35: #{tpu_custom_call.1} parent=1 // pred_check_branch
      %77 = sbr.rel (0) target = $region37
    $region36: #{tpu_custom_call.1} parent=1 // pred_region
      _
    $region37: #{tpu_custom_call.1} parent=1 // pred_fallthru
      _
    // Predicated region
    $region38: #{tpu_custom_call.1} parent=1 // pred_check
      _
    $region39: #{tpu_custom_call.1} parent=1 // pred_check_branch
      %79 = sbr.rel (0) target = $region41
    $region40: #{tpu_custom_call.1} parent=1 // pred_region
      %s81 = ssub.s32 2048, 2048
      %82 = vsyncadd [#allocation9], %s81
      %s83 = sshll.u32 [#allocation10], 4
      %s84 = int_to_ptr.vmem [resolvable:$true] %s83
      %89 = dma.hbm_to_vmem [thread:$0]  %s9, 2048, %s84, [#allocation9], 128, 128, 8
    $region41: #{tpu_custom_call.1} parent=1 // pred_fallthru
      _
    // Predicated region
    $region42: #{tpu_custom_call.1} parent=1 // pred_check
      _
    $region43: #{tpu_custom_call.1} parent=1 // pred_check_branch
      %91 = sbr.rel (0) target = $region45
    $region44: #{tpu_custom_call.1} parent=1 // pred_region
      _
    $region45: #{tpu_custom_call.1} parent=1 // pred_fallthru
      _
    // Predicated region
    $region46: #{tpu_custom_call.1} parent=1 // pred_check
      _
    $region47: #{tpu_custom_call.1} parent=1 // pred_check_branch
      %93 = sbr.rel (0) target = $region49
    $region48: #{tpu_custom_call.1} parent=1 // pred_region
      %94 = dma.done [#allocation3], 512
    $region49: #{tpu_custom_call.1} parent=1 // pred_fallthru
      _
    // Predicated region
    $region50: #{tpu_custom_call.1} parent=1 // pred_check
      _
    $region51: #{tpu_custom_call.1} parent=1 // pred_check_branch
      %96 = sbr.rel (0) target = $region53
    $region52: #{tpu_custom_call.1} parent=1 // pred_region
      %97 = dma.done [#allocation6], 2048
    $region53: #{tpu_custom_call.1} parent=1 // pred_fallthru
      _
    // Predicated region
    $region54: #{tpu_custom_call.1} parent=1 // pred_check
      _
    $region55: #{tpu_custom_call.1} parent=1 // pred_check_branch
      %99 = sbr.rel (0) target = $region57
    $region56: #{tpu_custom_call.1} parent=1 // pred_region
      %100 = dma.done [#allocation6], 2048
    $region57: #{tpu_custom_call.1} parent=1 // pred_fallthru
      _
    // Predicated region
    $region58: #{tpu_custom_call.1} parent=1 // pred_check
      _
    $region59: #{tpu_custom_call.1} parent=1 // pred_check_branch
      %102 = sbr.rel (0) target = $region61
    $region60: #{tpu_custom_call.1} parent=1 // pred_region
      %103 = dma.done [#allocation9], 2048
    $region61: #{tpu_custom_call.1} parent=1 // pred_fallthru
      _
    // Predicated region
    $region62: #{tpu_custom_call.1} parent=1 // pred_check
      _
    $region63: #{tpu_custom_call.1} parent=1 // pred_check_branch
      %105 = sbr.rel (0) target = $region65
    $region64: #{tpu_custom_call.1} parent=1 // pred_region
      %106 = dma.done [#allocation9], 2048
    $region65: #{tpu_custom_call.1} parent=1 // pred_fallthru
      _
    %v107 = vld [vmem:[%s0] sm:$0xff]
    %v108 = vld [vmem:[%s1] sm:$0xff]
    %v109 = vlaneseq
    %v110 = vand.u32 %v109, 127
    %111 = vset.pattern.permute.xlu0 0
    %112 = vperm.xlu0 %111, %v108
    %v113 = vpop.permute.xlu0 %112
    %vm114 = vcmp.eq.s32.totalorder %v110, %v113
    %v115 = vld [vmem:[#allocation2] sm:$0xff]
    %v116 = vld [vmem:[#allocation2 + $0x8] sm:$0xff]
    %v117 = vld [vmem:[#allocation2 + $0x10] sm:$0xff]
    %v118 = vld [vmem:[#allocation2 + $0x18] sm:$0xff]
    %v119 = vsel %vm114, 1, 0
    %v120 = vcvt.s32.f32 %v119
    %v121 = vld [vmem:[#allocation5] sm:$0xff]
    %v122 = vld [vmem:[#allocation5 + $0x8] sm:$0xff]
    %v123 = vld [vmem:[#allocation5 + $0x10] sm:$0xff]
    %v124 = vld [vmem:[#allocation5 + $0x18] sm:$0xff]
    %v125 = vld [vmem:[#allocation5 + $0x20] sm:$0xff]
    %v126 = vld [vmem:[#allocation5 + $0x28] sm:$0xff]
    %v127 = vld [vmem:[#allocation5 + $0x30] sm:$0xff]
    %v128 = vld [vmem:[#allocation5 + $0x38] sm:$0xff]
    %v129 = vld [vmem:[#allocation5 + $0x40] sm:$0xff]
    %v130 = vld [vmem:[#allocation5 + $0x48] sm:$0xff]
    %v131 = vld [vmem:[#allocation5 + $0x50] sm:$0xff]
    %v132 = vld [vmem:[#allocation5 + $0x58] sm:$0xff]
    %v133 = vld [vmem:[#allocation5 + $0x60] sm:$0xff]
    %v134 = vld [vmem:[#allocation5 + $0x68] sm:$0xff]
    %v135 = vld [vmem:[#allocation5 + $0x70] sm:$0xff]
    %v136 = vld [vmem:[#allocation5 + $0x78] sm:$0xff]
    %137 = vmatprep.subr.mxu0 0.0
    %138 = vmatpush1.msra.mxu0 %v121
    %139 = vmatprep.subr.mxu0 0.0
    %140 = vmatpush1.msra.mxu0 %v122
    %141 = vmatprep.subr.mxu0 0.0
    %142 = vmatpush1.msra.mxu0 %v123
    %143 = vmatprep.subr.mxu0 0.0
    %144 = vmatpush1.msra.mxu0 %v124
    %145 = vmatprep.subr.mxu0 0.0
    %146 = vmatpush1.msra.mxu0 %v125
    %147 = vmatprep.subr.mxu0 0.0
    %148 = vmatpush1.msra.mxu0 %v126
    %149 = vmatprep.subr.mxu0 0.0
    %150 = vmatpush1.msra.mxu0 %v127
    %151 = vmatprep.subr.mxu0 0.0
    %152 = vmatpush1.msra.mxu0 %v128
    %153 = vmatprep.subr.mxu0 0.0
    %154 = vmatpush1.msra.mxu0 %v129
    %155 = vmatprep.subr.mxu0 0.0
    %156 = vmatpush1.msra.mxu0 %v130
    %157 = vmatprep.subr.mxu0 0.0
    %158 = vmatpush1.msra.mxu0 %v131
    %159 = vmatprep.subr.mxu0 0.0
    %160 = vmatpush1.msra.mxu0 %v132
    %161 = vmatprep.subr.mxu0 0.0
    %162 = vmatpush1.msra.mxu0 %v133
    %163 = vmatprep.subr.mxu0 0.0
    %164 = vmatpush1.msra.mxu0 %v134
    %165 = vmatprep.subr.mxu0 0.0
    %166 = vmatpush1.msra.mxu0 %v135
    %167 = vmatprep.subr.mxu0 0.0
    %168 = vmatpush1.msra.mxu0 %v136
    %169 = vmatprep.subr.mxu0 0.0
    %170 = vmatpush1.msra.mxu0 0.0
    %171 = vmatprep.subr.mxu0 0.0
    %172 = vmatpush1.msra.mxu0 0.0
    %173 = vmatprep.subr.mxu0 0.0
    %174 = vmatpush1.msra.mxu0 0.0
    %175 = vmatprep.subr.mxu0 0.0
    %176 = vmatpush1.msra.mxu0 0.0
    %177 = vmatprep.subr.mxu0 0.0
    %178 = vmatpush1.msra.mxu0 0.0
    %179 = vmatprep.subr.mxu0 0.0
    %180 = vmatpush1.msra.mxu0 0.0
    %181 = vmatprep.subr.mxu0 0.0
    %182 = vmatpush1.msra.mxu0 0.0
    %183 = vmatprep.subr.mxu0 0.0
    %184 = vmatpush1.msra.mxu0 0.0
    %185 = vmatprep.subr.mxu0 0.0
    %186 = vmatpush1.msra.mxu0 0.0
    %187 = vmatprep.subr.mxu0 0.0
    %188 = vmatpush1.msra.mxu0 0.0
    %189 = vmatprep.subr.mxu0 0.0
    %190 = vmatpush1.msra.mxu0 0.0
    %191 = vmatprep.subr.mxu0 0.0
    %192 = vmatpush1.msra.mxu0 0.0
    %193 = vmatprep.subr.mxu0 0.0
    %194 = vmatpush1.msra.mxu0 0.0
    %195 = vmatprep.subr.mxu0 0.0
    %196 = vmatpush1.msra.mxu0 0.0
    %197 = vmatprep.subr.mxu0 0.0
    %198 = vmatpush1.msra.mxu0 0.0
    %199 = vmatprep.subr.mxu0 0.0
    %200 = vmatpush1.msra.mxu0 0.0
    %201 = vmatprep.mubr.f32.mxu0 0.0
    %202 = vmatmul.mubr.f32.gmra.mrb[0].mxu0 %v120
    %v203 = vpop.f32.mrb[0].mxu0
    %v204 = vadd.f32 0.0, %v203
    %v205 = vpop.f32.mrb[0].mxu0
    %206 = vdwg.mxu0
    %vm207 = vcmask 261120
    %v209 = vsel %vm207, %v107, 0
    %211 = vmatprep.subr.mxu0 0.0
    %212 = vmatpush1.msra.mxu0 %v115
    %213 = vmatprep.subr.mxu0 0.0
    %214 = vmatpush1.msra.mxu0 %v116
    %215 = vmatprep.subr.mxu0 0.0
    %216 = vmatpush1.msra.mxu0 %v117
    %217 = vmatprep.subr.mxu0 0.0
    %218 = vmatpush1.msra.mxu0 %v118
    %219 = vmatprep.subr.mxu0 0.0
    %220 = vmatpush1.msra.mxu0 0.0
    %221 = vmatprep.subr.mxu0 0.0
    %222 = vmatpush1.msra.mxu0 0.0
    %223 = vmatprep.subr.mxu0 0.0
    %224 = vmatpush1.msra.mxu0 0.0
    %225 = vmatprep.subr.mxu0 0.0
    %226 = vmatpush1.msra.mxu0 0.0
    %227 = vmatprep.subr.mxu0 0.0
    %228 = vmatpush1.msra.mxu0 0.0
    %229 = vmatprep.subr.mxu0 0.0
    %230 = vmatpush1.msra.mxu0 0.0
    %231 = vmatprep.subr.mxu0 0.0
    %232 = vmatpush1.msra.mxu0 0.0
    %233 = vmatprep.subr.mxu0 0.0
    %234 = vmatpush1.msra.mxu0 0.0
    %235 = vmatprep.subr.mxu0 0.0
    %236 = vmatpush1.msra.mxu0 0.0
    %237 = vmatprep.subr.mxu0 0.0
    %238 = vmatpush1.msra.mxu0 0.0
    %239 = vmatprep.subr.mxu0 0.0
    %240 = vmatpush1.msra.mxu0 0.0
    %241 = vmatprep.subr.mxu0 0.0
    %242 = vmatpush1.msra.mxu0 0.0
    %243 = vmatprep.subr.mxu0 0.0
    %244 = vmatpush1.msra.mxu0 0.0
    %245 = vmatprep.subr.mxu0 0.0
    %246 = vmatpush1.msra.mxu0 0.0
    %247 = vmatprep.subr.mxu0 0.0
    %248 = vmatpush1.msra.mxu0 0.0
    %249 = vmatprep.subr.mxu0 0.0
    %250 = vmatpush1.msra.mxu0 0.0
    %251 = vmatprep.subr.mxu0 0.0
    %252 = vmatpush1.msra.mxu0 0.0
    %253 = vmatprep.subr.mxu0 0.0
    %254 = vmatpush1.msra.mxu0 0.0
    %255 = vmatprep.subr.mxu0 0.0
    %256 = vmatpush1.msra.mxu0 0.0
    %257 = vmatprep.subr.mxu0 0.0
    %258 = vmatpush1.msra.mxu0 0.0
    %259 = vmatprep.subr.mxu0 0.0
    %260 = vmatpush1.msra.mxu0 0.0
    %261 = vmatprep.subr.mxu0 0.0
    %262 = vmatpush1.msra.mxu0 0.0
    %263 = vmatprep.subr.mxu0 0.0
    %264 = vmatpush1.msra.mxu0 0.0
    %265 = vmatprep.subr.mxu0 0.0
    %266 = vmatpush1.msra.mxu0 0.0
    %267 = vmatprep.subr.mxu0 0.0
    %268 = vmatpush1.msra.mxu0 0.0
    %269 = vmatprep.subr.mxu0 0.0
    %270 = vmatpush1.msra.mxu0 0.0
    %271 = vmatprep.subr.mxu0 0.0
    %272 = vmatpush1.msra.mxu0 0.0
    %273 = vmatprep.subr.mxu0 0.0
    %274 = vmatpush1.msra.mxu0 0.0
    %275 = vmatprep.mubr.f32.mxu0 0.0
    %276 = vmatmul.mubr.f32.gmra.mrb[0].mxu0 %v209
    %v277 = vpop.f32.mrb[0].mxu0
    %v278 = vadd.f32 %v204, %v277
    %v279 = vpop.f32.mrb[0].mxu0
    %280 = vdwg.mxu0
    %v281 = vld [vmem:[%s4] sm:$0x1]
    %v283 = vlaneseq
    %v284 = vshrl.u32 %v283, 7
    %v285 = vsub.s32 0, %v284
    %v286 = vrot.slane %v281, %v285
    %v288 = vadd.f32 %v278, %v286
    %vm289 = vcmp.gt.f32.partialorder %v288, 0.0
    %v290 = vmul.f32 %v288, 0.2
    %v291 = vsel %vm289, %v288, %v290
    %v292 = vld [vmem:[#allocation7] sm:$0xff]
    %v293 = vld [vmem:[#allocation7 + $0x8] sm:$0xff]
    %v294 = vld [vmem:[#allocation7 + $0x10] sm:$0xff]
    %v295 = vld [vmem:[#allocation7 + $0x18] sm:$0xff]
    %v296 = vld [vmem:[#allocation7 + $0x20] sm:$0xff]
    %v297 = vld [vmem:[#allocation7 + $0x28] sm:$0xff]
    %v298 = vld [vmem:[#allocation7 + $0x30] sm:$0xff]
    %v299 = vld [vmem:[#allocation7 + $0x38] sm:$0xff]
    %v300 = vld [vmem:[#allocation7 + $0x40] sm:$0xff]
    %v301 = vld [vmem:[#allocation7 + $0x48] sm:$0xff]
    %v302 = vld [vmem:[#allocation7 + $0x50] sm:$0xff]
    %v303 = vld [vmem:[#allocation7 + $0x58] sm:$0xff]
    %v304 = vld [vmem:[#allocation7 + $0x60] sm:$0xff]
    %v305 = vld [vmem:[#allocation7 + $0x68] sm:$0xff]
    %v306 = vld [vmem:[#allocation7 + $0x70] sm:$0xff]
    %v307 = vld [vmem:[#allocation7 + $0x78] sm:$0xff]
    %v308 = vld [vmem:[%s6] sm:$0x1]
    %v310 = vlaneseq
    %v311 = vshrl.u32 %v310, 7
    %v312 = vsub.s32 0, %v311
    %v313 = vrot.slane %v308, %v312
    %315 = vmatprep.subr.mxu0 0.0
    %316 = vmatpush1.msra.mxu0 %v292
    %317 = vmatprep.subr.mxu0 0.0
    %318 = vmatpush1.msra.mxu0 %v293
    %319 = vmatprep.subr.mxu0 0.0
    %320 = vmatpush1.msra.mxu0 %v294
    %321 = vmatprep.subr.mxu0 0.0
    %322 = vmatpush1.msra.mxu0 %v295
    %323 = vmatprep.subr.mxu0 0.0
    %324 = vmatpush1.msra.mxu0 %v296
    %325 = vmatprep.subr.mxu0 0.0
    %326 = vmatpush1.msra.mxu0 %v297
    %327 = vmatprep.subr.mxu0 0.0
    %328 = vmatpush1.msra.mxu0 %v298
    %329 = vmatprep.subr.mxu0 0.0
    %330 = vmatpush1.msra.mxu0 %v299
    %331 = vmatprep.subr.mxu0 0.0
    %332 = vmatpush1.msra.mxu0 %v300
    %333 = vmatprep.subr.mxu0 0.0
    %334 = vmatpush1.msra.mxu0 %v301
    %335 = vmatprep.subr.mxu0 0.0
    %336 = vmatpush1.msra.mxu0 %v302
    %337 = vmatprep.subr.mxu0 0.0
    %338 = vmatpush1.msra.mxu0 %v303
    %339 = vmatprep.subr.mxu0 0.0
    %340 = vmatpush1.msra.mxu0 %v304
    %341 = vmatprep.subr.mxu0 0.0
    %342 = vmatpush1.msra.mxu0 %v305
    %343 = vmatprep.subr.mxu0 0.0
    %344 = vmatpush1.msra.mxu0 %v306
    %345 = vmatprep.subr.mxu0 0.0
    %346 = vmatpush1.msra.mxu0 %v307
    %347 = vmatprep.subr.mxu0 0.0
    %348 = vmatpush1.msra.mxu0 0.0
    %349 = vmatprep.subr.mxu0 0.0
    %350 = vmatpush1.msra.mxu0 0.0
    %351 = vmatprep.subr.mxu0 0.0
    %352 = vmatpush1.msra.mxu0 0.0
    %353 = vmatprep.subr.mxu0 0.0
    %354 = vmatpush1.msra.mxu0 0.0
    %355 = vmatprep.subr.mxu0 0.0
    %356 = vmatpush1.msra.mxu0 0.0
    %357 = vmatprep.subr.mxu0 0.0
    %358 = vmatpush1.msra.mxu0 0.0
    %359 = vmatprep.subr.mxu0 0.0
    %360 = vmatpush1.msra.mxu0 0.0
    %361 = vmatprep.subr.mxu0 0.0
    %362 = vmatpush1.msra.mxu0 0.0
    %363 = vmatprep.subr.mxu0 0.0
    %364 = vmatpush1.msra.mxu0 0.0
    %365 = vmatprep.subr.mxu0 0.0
    %366 = vmatpush1.msra.mxu0 0.0
    %367 = vmatprep.subr.mxu0 0.0
    %368 = vmatpush1.msra.mxu0 0.0
    %369 = vmatprep.subr.mxu0 0.0
    %370 = vmatpush1.msra.mxu0 0.0
    %371 = vmatprep.subr.mxu0 0.0
    %372 = vmatpush1.msra.mxu0 0.0
    %373 = vmatprep.subr.mxu0 0.0
    %374 = vmatpush1.msra.mxu0 0.0
    %375 = vmatprep.subr.mxu0 0.0
    %376 = vmatpush1.msra.mxu0 0.0
    %377 = vmatprep.subr.mxu0 0.0
    %378 = vmatpush1.msra.mxu0 0.0
    %379 = vmatprep.mubr.f32.mxu0 0.0
    %380 = vmatmul.mubr.f32.gmra.mrb[0].mxu0 %v291
    %v381 = vpop.f32.mrb[0].mxu0
    %v382 = vadd.f32 %v313, %v381
    %v383 = vpop.f32.mrb[0].mxu0
    %384 = vdwg.mxu0
    %vm385 = vcmp.gt.f32.partialorder %v382, 0.0
    %v386 = vmul.f32 %v382, 0.2
    %v387 = vsel %vm385, %v382, %v386
    %v388 = vld [vmem:[#allocation8] sm:$0xff]
    %v389 = vld [vmem:[#allocation8 + $0x8] sm:$0xff]
    %v390 = vld [vmem:[#allocation8 + $0x10] sm:$0xff]
    %v391 = vld [vmem:[#allocation8 + $0x18] sm:$0xff]
    %v392 = vld [vmem:[#allocation8 + $0x20] sm:$0xff]
    %v393 = vld [vmem:[#allocation8 + $0x28] sm:$0xff]
    %v394 = vld [vmem:[#allocation8 + $0x30] sm:$0xff]
    %v395 = vld [vmem:[#allocation8 + $0x38] sm:$0xff]
    %v396 = vld [vmem:[#allocation8 + $0x40] sm:$0xff]
    %v397 = vld [vmem:[#allocation8 + $0x48] sm:$0xff]
    %v398 = vld [vmem:[#allocation8 + $0x50] sm:$0xff]
    %v399 = vld [vmem:[#allocation8 + $0x58] sm:$0xff]
    %v400 = vld [vmem:[#allocation8 + $0x60] sm:$0xff]
    %v401 = vld [vmem:[#allocation8 + $0x68] sm:$0xff]
    %v402 = vld [vmem:[#allocation8 + $0x70] sm:$0xff]
    %v403 = vld [vmem:[#allocation8 + $0x78] sm:$0xff]
    %v404 = vld [vmem:[%s8] sm:$0x1]
    %v406 = vlaneseq
    %v407 = vshrl.u32 %v406, 7
    %v408 = vsub.s32 0, %v407
    %v409 = vrot.slane %v404, %v408
    %411 = vmatprep.subr.mxu0 0.0
    %412 = vmatpush1.msra.mxu0 %v388
    %413 = vmatprep.subr.mxu0 0.0
    %414 = vmatpush1.msra.mxu0 %v389
    %415 = vmatprep.subr.mxu0 0.0
    %416 = vmatpush1.msra.mxu0 %v390
    %417 = vmatprep.subr.mxu0 0.0
    %418 = vmatpush1.msra.mxu0 %v391
    %419 = vmatprep.subr.mxu0 0.0
    %420 = vmatpush1.msra.mxu0 %v392
    %421 = vmatprep.subr.mxu0 0.0
    %422 = vmatpush1.msra.mxu0 %v393
    %423 = vmatprep.subr.mxu0 0.0
    %424 = vmatpush1.msra.mxu0 %v394
    %425 = vmatprep.subr.mxu0 0.0
    %426 = vmatpush1.msra.mxu0 %v395
    %427 = vmatprep.subr.mxu0 0.0
    %428 = vmatpush1.msra.mxu0 %v396
    %429 = vmatprep.subr.mxu0 0.0
    %430 = vmatpush1.msra.mxu0 %v397
    %431 = vmatprep.subr.mxu0 0.0
    %432 = vmatpush1.msra.mxu0 %v398
    %433 = vmatprep.subr.mxu0 0.0
    %434 = vmatpush1.msra.mxu0 %v399
    %435 = vmatprep.subr.mxu0 0.0
    %436 = vmatpush1.msra.mxu0 %v400
    %437 = vmatprep.subr.mxu0 0.0
    %438 = vmatpush1.msra.mxu0 %v401
    %439 = vmatprep.subr.mxu0 0.0
    %440 = vmatpush1.msra.mxu0 %v402
    %441 = vmatprep.subr.mxu0 0.0
    %442 = vmatpush1.msra.mxu0 %v403
    %443 = vmatprep.subr.mxu0 0.0
    %444 = vmatpush1.msra.mxu0 0.0
    %445 = vmatprep.subr.mxu0 0.0
    %446 = vmatpush1.msra.mxu0 0.0
    %447 = vmatprep.subr.mxu0 0.0
    %448 = vmatpush1.msra.mxu0 0.0
    %449 = vmatprep.subr.mxu0 0.0
    %450 = vmatpush1.msra.mxu0 0.0
    %451 = vmatprep.subr.mxu0 0.0
    %452 = vmatpush1.msra.mxu0 0.0
    %453 = vmatprep.subr.mxu0 0.0
    %454 = vmatpush1.msra.mxu0 0.0
    %455 = vmatprep.subr.mxu0 0.0
    %456 = vmatpush1.msra.mxu0 0.0
    %457 = vmatprep.subr.mxu0 0.0
    %458 = vmatpush1.msra.mxu0 0.0
    %459 = vmatprep.subr.mxu0 0.0
    %460 = vmatpush1.msra.mxu0 0.0
    %461 = vmatprep.subr.mxu0 0.0
    %462 = vmatpush1.msra.mxu0 0.0
    %463 = vmatprep.subr.mxu0 0.0
    %464 = vmatpush1.msra.mxu0 0.0
    %465 = vmatprep.subr.mxu0 0.0
    %466 = vmatpush1.msra.mxu0 0.0
    %467 = vmatprep.subr.mxu0 0.0
    %468 = vmatpush1.msra.mxu0 0.0
    %469 = vmatprep.subr.mxu0 0.0
    %470 = vmatpush1.msra.mxu0 0.0
    %471 = vmatprep.subr.mxu0 0.0
    %472 = vmatpush1.msra.mxu0 0.0
    %473 = vmatprep.subr.mxu0 0.0
    %474 = vmatpush1.msra.mxu0 0.0
    %475 = vmatprep.mubr.f32.mxu0 0.0
    %476 = vmatmul.mubr.f32.gmra.mrb[0].mxu0 %v387
    %v477 = vpop.f32.mrb[0].mxu0
    %v478 = vadd.f32 %v409, %v477
    %v479 = vpop.f32.mrb[0].mxu0
    %480 = vdwg.mxu0
    %vm481 = vcmp.gt.f32.partialorder %v478, 0.0
    %v482 = vmul.f32 %v478, 0.2
    %v483 = vsel %vm481, %v478, %v482
    %v484 = vld [vmem:[#allocation10] sm:$0xff]
    %v485 = vld [vmem:[#allocation10 + $0x8] sm:$0xff]
    %v486 = vld [vmem:[#allocation10 + $0x10] sm:$0xff]
    %v487 = vld [vmem:[#allocation10 + $0x18] sm:$0xff]
    %v488 = vld [vmem:[#allocation10 + $0x20] sm:$0xff]
    %v489 = vld [vmem:[#allocation10 + $0x28] sm:$0xff]
    %v490 = vld [vmem:[#allocation10 + $0x30] sm:$0xff]
    %v491 = vld [vmem:[#allocation10 + $0x38] sm:$0xff]
    %v492 = vld [vmem:[#allocation10 + $0x40] sm:$0xff]
    %v493 = vld [vmem:[#allocation10 + $0x48] sm:$0xff]
    %v494 = vld [vmem:[#allocation10 + $0x50] sm:$0xff]
    %v495 = vld [vmem:[#allocation10 + $0x58] sm:$0xff]
    %v496 = vld [vmem:[#allocation10 + $0x60] sm:$0xff]
    %v497 = vld [vmem:[#allocation10 + $0x68] sm:$0xff]
    %v498 = vld [vmem:[#allocation10 + $0x70] sm:$0xff]
    %v499 = vld [vmem:[#allocation10 + $0x78] sm:$0xff]
    %v500 = vld [vmem:[%s10] sm:$0x1]
    %v502 = vlaneseq
    %v503 = vshrl.u32 %v502, 7
    %v504 = vsub.s32 0, %v503
    %v505 = vrot.slane %v500, %v504
    %507 = vmatprep.subr.mxu0 0.0
    %508 = vmatpush1.msra.mxu0 %v484
    %509 = vmatprep.subr.mxu0 0.0
    %510 = vmatpush1.msra.mxu0 %v485
    %511 = vmatprep.subr.mxu0 0.0
    %512 = vmatpush1.msra.mxu0 %v486
    %513 = vmatprep.subr.mxu0 0.0
    %514 = vmatpush1.msra.mxu0 %v487
    %515 = vmatprep.subr.mxu0 0.0
    %516 = vmatpush1.msra.mxu0 %v488
    %517 = vmatprep.subr.mxu0 0.0
    %518 = vmatpush1.msra.mxu0 %v489
    %519 = vmatprep.subr.mxu0 0.0
    %520 = vmatpush1.msra.mxu0 %v490
    %521 = vmatprep.subr.mxu0 0.0
    %522 = vmatpush1.msra.mxu0 %v491
    %523 = vmatprep.subr.mxu0 0.0
    %524 = vmatpush1.msra.mxu0 %v492
    %525 = vmatprep.subr.mxu0 0.0
    %526 = vmatpush1.msra.mxu0 %v493
    %527 = vmatprep.subr.mxu0 0.0
    %528 = vmatpush1.msra.mxu0 %v494
    %529 = vmatprep.subr.mxu0 0.0
    %530 = vmatpush1.msra.mxu0 %v495
    %531 = vmatprep.subr.mxu0 0.0
    %532 = vmatpush1.msra.mxu0 %v496
    %533 = vmatprep.subr.mxu0 0.0
    %534 = vmatpush1.msra.mxu0 %v497
    %535 = vmatprep.subr.mxu0 0.0
    %536 = vmatpush1.msra.mxu0 %v498
    %537 = vmatprep.subr.mxu0 0.0
    %538 = vmatpush1.msra.mxu0 %v499
    %539 = vmatprep.subr.mxu0 0.0
    %540 = vmatpush1.msra.mxu0 0.0
    %541 = vmatprep.subr.mxu0 0.0
    %542 = vmatpush1.msra.mxu0 0.0
    %543 = vmatprep.subr.mxu0 0.0
    %544 = vmatpush1.msra.mxu0 0.0
    %545 = vmatprep.subr.mxu0 0.0
    %546 = vmatpush1.msra.mxu0 0.0
    %547 = vmatprep.subr.mxu0 0.0
    %548 = vmatpush1.msra.mxu0 0.0
    %549 = vmatprep.subr.mxu0 0.0
    %550 = vmatpush1.msra.mxu0 0.0
    %551 = vmatprep.subr.mxu0 0.0
    %552 = vmatpush1.msra.mxu0 0.0
    %553 = vmatprep.subr.mxu0 0.0
    %554 = vmatpush1.msra.mxu0 0.0
    %555 = vmatprep.subr.mxu0 0.0
    %556 = vmatpush1.msra.mxu0 0.0
    %557 = vmatprep.subr.mxu0 0.0
    %558 = vmatpush1.msra.mxu0 0.0
    %559 = vmatprep.subr.mxu0 0.0
    %560 = vmatpush1.msra.mxu0 0.0
    %561 = vmatprep.subr.mxu0 0.0
    %562 = vmatpush1.msra.mxu0 0.0
    %563 = vmatprep.subr.mxu0 0.0
    %564 = vmatpush1.msra.mxu0 0.0
    %565 = vmatprep.subr.mxu0 0.0
    %566 = vmatpush1.msra.mxu0 0.0
    %567 = vmatprep.subr.mxu0 0.0
    %568 = vmatpush1.msra.mxu0 0.0
    %569 = vmatprep.subr.mxu0 0.0
    %570 = vmatpush1.msra.mxu0 0.0
    %571 = vmatprep.mubr.f32.mxu0 0.0
    %572 = vmatmul.mubr.f32.gmra.mrb[0].mxu0 %v483
    %v573 = vpop.f32.mrb[0].mxu0
    %v574 = vadd.f32 %v505, %v573
    %v575 = vpop.f32.mrb[0].mxu0
    %576 = vdwg.mxu0
    %v577 = vsel %vm114, %v574, 0.0
    %578 = vadd.xlane.f32.xlu0 %v577
    %v579 = vpop.xlane.xlu0 %578
    %580 = vst [vmem:[#allocation11] sm:$0xff] %v579
    // Predicated region
    $region66: #{tpu_custom_call.1} parent=1 // pred_check
      _
    $region67: #{tpu_custom_call.1} parent=1 // pred_check_branch
      %582 = sbr.rel (0) target = $region69
    $region68: #{tpu_custom_call.1} parent=1 // pred_region
      %s584 = ssub.s32 128, 128
      %585 = vsyncadd [#allocation4], %s584
      %s587 = sshll.u32 [#allocation11], 4
      %s588 = int_to_ptr.vmem [resolvable:$true] %s587
      %590 = dma.vmem_to_hbm [thread:$0]  %s588, 128, %s11, [#allocation4]
    $region69: #{tpu_custom_call.1} parent=1 // pred_fallthru
      _
    // Predicated region
    $region70: #{tpu_custom_call.1} parent=1 // pred_check
      _
    $region71: #{tpu_custom_call.1} parent=1 // pred_check_branch
      %592 = sbr.rel (0) target = $region73
    $region72: #{tpu_custom_call.1} parent=1 // pred_region
      %593 = dma.done [#allocation4], 128
    $region73: #{tpu_custom_call.1} parent=1 // pred_fallthru
      _
    %594 = vsyncpa [#allocation3], 1
    %595 = vsyncpa [#allocation6], 1
    %596 = vsyncpa [#allocation9], 1
    %597 = vsyncpa [#allocation4], 1

</llo_original>
